<compile_context>
chip_gen: v5e
topology: v5e:2x2
jax: 0.10.0
libtpu: 0.0.40
codegen_flags: <defaults>
</compile_context>

<pallas_src>
import jax
import jax.numpy as jnp
from jax.experimental import pallas as pl
from jax.experimental.pallas import tpu as pltpu


def _round_up(x, m):
    return ((x + m - 1) // m) * m


# ---------------------------------------------------------------------------
# Kernel
# ---------------------------------------------------------------------------
def critic_kernel(x_ref, w1_ref, b1_ref, w2_ref, b2_ref,
                  w3_ref, b3_ref, w4_ref, b4_ref, out_ref):
    # One batch tile per grid step; the (padded, bf16) weight stack stays
    # resident in VMEM across grid steps.  bf16 MXU passes, f32 accumulate.
    # The in-kernel cast of x is free VPU filler under the MXU; do not hoist
    # it into a standalone wrapper-side cast.
    x = x_ref[...].astype(jnp.bfloat16)

    h = jnp.dot(x, w1_ref[...], preferred_element_type=jnp.float32) + b1_ref[...]
    h = jnp.maximum(h, 0.0).astype(jnp.bfloat16)

    h = jnp.dot(h, w2_ref[...], preferred_element_type=jnp.float32) + b2_ref[...]
    h = jnp.maximum(h, 0.0).astype(jnp.bfloat16)

    h = jnp.dot(h, w3_ref[...], preferred_element_type=jnp.float32) + b3_ref[...]
    h = jnp.maximum(h, 0.0).astype(jnp.bfloat16)

    out_ref[...] = (
        jnp.dot(h, w4_ref[...], preferred_element_type=jnp.float32) + b4_ref[...]
    )


# ---------------------------------------------------------------------------
# Wrapper
# ---------------------------------------------------------------------------
def _critic_forward(x, padded_params, tile_b, single_buffer_weights):
    w1, b1, w2, b2, w3, b3, w4, b4 = padded_params
    batch, num_input = x.shape
    num_output = w4.shape[1]
    h1, h2, h3 = w1.shape[1], w2.shape[1], w3.shape[1]

    # Tile selection:
    #  * sublane-aligned (multiple of 8),
    #  * capped at tile_b (default 512: amortizes step overhead on v6e/v7x
    #    without bloating f32 intermediates / vst traffic on v5e),
    #  * clamped to ceil(batch/2) so the "parallel" batch axis keeps >= 2
    #    grid steps whenever the batch allows (v7x has 2 TensorCores).
    tb = max(8, min(tile_b, _round_up(-(-batch // 2), 8)))
    grid = (pl.cdiv(batch, tb),)   # ragged last block -> masked writes

    def resident(shape):
        # Constant block index -> DMA'd once, kept in VMEM across grid steps.
        if single_buffer_weights:
            return pl.BlockSpec(shape, lambda i: (0, 0),
                                pipeline_mode=pl.Buffered(1))
        return pl.BlockSpec(shape, lambda i: (0, 0))

    weight_bytes = (2 * (w1.size + w2.size + w3.size + w4.size)
                    + 4 * (b1.size + b2.size + b3.size + b4.size))
    cost = pl.CostEstimate(
        flops=2 * batch * (num_input * h1 + h1 * h2 + h2 * h3 + h3 * num_output),
        transcendentals=0,
        bytes_accessed=batch * 4 * (num_input + num_output) + weight_bytes,
    )

    return pl.pallas_call(
        critic_kernel,
        out_shape=jax.ShapeDtypeStruct((batch, num_output), jnp.float32),
        grid=grid,
        in_specs=[
            pl.BlockSpec((tb, num_input), lambda i: (i, 0)),   # x: streamed
            resident(w1.shape), resident(b1.shape),
            resident(w2.shape), resident(b2.shape),
            resident(w3.shape), resident(b3.shape),
            resident(w4.shape), resident(b4.shape),
        ],
        out_specs=pl.BlockSpec((tb, num_output), lambda i: (i, 0)),
        compiler_params=pltpu.CompilerParams(
            dimension_semantics=("parallel",)),
        cost_estimate=cost,
    )(x, w1, b1, w2, b2, w3, b3, w4, b4)


_critic_forward_jit = jax.jit(
    _critic_forward, static_argnames=("tile_b", "single_buffer_weights"))

_single_buffer_ok = True


def critic_forward(x, padded_params, tile_b=512):
    """Fused Critic forward.  Prefers single-buffered resident weights and
    falls back to default buffering if this jax build rejects Buffered(1)."""
    global _single_buffer_ok
    if _single_buffer_ok:
        try:
            return _critic_forward_jit(x, padded_params, tile_b=tile_b,
                                       single_buffer_weights=True)
        except Exception:
            _single_buffer_ok = False
    return _critic_forward_jit(x, padded_params, tile_b=tile_b,
                               single_buffer_weights=False)


# ---------------------------------------------------------------------------
# Parameters
# ---------------------------------------------------------------------------
def init_linear(key, fan_in, fan_out):
    """PyTorch nn.Linear default init: U(-1/sqrt(fan_in), 1/sqrt(fan_in))."""
    kw, kb = jax.random.split(key)
    bound = 1.0 / jnp.sqrt(jnp.float32(fan_in))
    # Stored (in_features, out_features) so forward is x @ W + b.
    w = jax.random.uniform(kw, (fan_in, fan_out), jnp.float32, -bound, bound)
    b = jax.random.uniform(kb, (1, fan_out), jnp.float32, -bound, bound)
    return w, b


def make_critic_params(key, num_input, num_output=1, node_num=400):
    """Logical (unpadded) f32 parameters matching the PyTorch module."""
    k1, k2, k3, k4 = jax.random.split(key, 4)
    w1, b1 = init_linear(k1, num_input, node_num)
    w2, b2 = init_linear(k2, node_num, node_num)
    w3, b3 = init_linear(k3, node_num, 100)
    w4, b4 = init_linear(k4, 100, num_output)
    return (w1, b1, w2, b2, w3, b3, w4, b4)


def _pad2(a, rows, cols, dtype):
    r, c = a.shape
    return jnp.pad(a, ((0, rows - r), (0, cols - c))).astype(dtype)


def prep_params_for_kernel(params):
    """Zero-pad hidden dims to lane multiples (400->512, 100->128) and cast
    weights to bf16; biases stay f32 (added after the f32 accumulate).
    NOTE: the padded rows/cols must stay exactly zero if params are updated
    in padded form."""
    w1, b1, w2, b2, w3, b3, w4, b4 = params
    num_input = w1.shape[0]
    h1 = _round_up(w1.shape[1], 128)    # 400 -> 512
    h2 = _round_up(w2.shape[1], 128)    # 400 -> 512
    h3 = _round_up(w3.shape[1], 128)    # 100 -> 128
    num_output = w4.shape[1]            # keep the value head at width 1

    return (
        _pad2(w1, num_input, h1, jnp.bfloat16), _pad2(b1, 1, h1, jnp.float32),
        _pad2(w2, h1, h2, jnp.bfloat16),        _pad2(b2, 1, h2, jnp.float32),
        _pad2(w3, h2, h3, jnp.bfloat16),        _pad2(b3, 1, h3, jnp.float32),
        _pad2(w4, h3, num_output, jnp.bfloat16), _pad2(b4, 1, num_output, jnp.float32),
    )


# ---------------------------------------------------------------------------
# References (for sanity checking)
# ---------------------------------------------------------------------------
def reference_forward_f32(x, params):
    """Full-f32 pure-JAX forward, equivalent to the PyTorch module."""
    w1, b1, w2, b2, w3, b3, w4, b4 = params
    h = jnp.maximum(x @ w1 + b1, 0.0)
    h = jnp.maximum(h @ w2 + b2, 0.0)
    h = jnp.maximum(h @ w3 + b3, 0.0)
    return h @ w4 + b4


def reference_forward_mirror(x, padded_params):
    """Pure-JAX mirror of the kernel's exact bf16/f32 numerics."""
    w1, b1, w2, b2, w3, b3, w4, b4 = padded_params
    h = x.astype(jnp.bfloat16)
    h = jnp.maximum(jnp.dot(h, w1, preferred_element_type=jnp.float32) + b1,
                    0.0).astype(jnp.bfloat16)
    h = jnp.maximum(jnp.dot(h, w2, preferred_element_type=jnp.float32) + b2,
                    0.0).astype(jnp.bfloat16)
    h = jnp.maximum(jnp.dot(h, w3, preferred_element_type=jnp.float32) + b3,
                    0.0).astype(jnp.bfloat16)
    return jnp.dot(h, w4, preferred_element_type=jnp.float32) + b4


if __name__ == "__main__":
    key = jax.random.PRNGKey(0)
    k_params, k_x, k_x2 = jax.random.split(key, 3)

    num_input = 32      # state dimension
    num_output = 1      # value head
    node_num = 400      # module default

    params = make_critic_params(k_params, num_input, num_output, node_num)
    padded_params = prep_params_for_kernel(params)

    def check(x):
        value = jax.block_until_ready(critic_forward(x, padded_params))
        assert value.shape == (x.shape[0], num_output)
        # Tight check vs a pure-JAX mirror of the kernel's bf16/f32 numerics.
        mirror = reference_forward_mirror(x, padded_params)
        assert jnp.allclose(value, mirror, atol=2e-3, rtol=2e-3), (
            float(jnp.max(jnp.abs(value - mirror))))
        # Loose check vs the full-f32 module forward (bf16 weight quantization).
        ref = reference_forward_f32(x, params)
        assert jnp.allclose(value, ref, atol=5e-2, rtol=5e-2), (
            float(jnp.max(jnp.abs(value - ref))))

    # Small batch: single grid step.
    check(jax.random.normal(k_x, (8, num_input), jnp.float32))
    # Non-divisible batch: multi-step grid + ragged last block (no jnp.pad).
    check(jax.random.normal(k_x2, (50, num_input), jnp.float32))

    print("KERNEL_OK")
</pallas_src>

<mosaic_0001>
module attributes {stable_mosaic.version = 11 : i64} {
  func.func @critic_kernel(%arg0: i32, %arg1: memref<8x32xf32, #tpu.memory_space<vmem>>, %arg2: memref<32x512xbf16, #tpu.memory_space<vmem>>, %arg3: memref<1x512xf32, #tpu.memory_space<vmem>>, %arg4: memref<512x512xbf16, #tpu.memory_space<vmem>>, %arg5: memref<1x512xf32, #tpu.memory_space<vmem>>, %arg6: memref<512x128xbf16, #tpu.memory_space<vmem>>, %arg7: memref<1x128xf32, #tpu.memory_space<vmem>>, %arg8: memref<128x1xbf16, #tpu.memory_space<vmem>>, %arg9: memref<1x1xf32, #tpu.memory_space<vmem>>, %arg10: memref<8x1xf32, #tpu.memory_space<vmem>>) attributes {dimension_semantics = [#tpu.dimension_semantics<parallel>], iteration_bounds = array<i64: 1>, scalar_prefetch = 0 : i64, scratch_operands = 0 : i64, tpu.core_type = #tpu.core_type<tc>, window_params = [{transform_indices = @transform_0, window_bounds = array<i64: 8, 32>}, {pipeline_mode = #tpu.pipeline_mode<synchronous>, transform_indices = @transform_1, window_bounds = array<i64: 32, 512>}, {pipeline_mode = #tpu.pipeline_mode<synchronous>, transform_indices = @transform_2, window_bounds = array<i64: 1, 512>}, {pipeline_mode = #tpu.pipeline_mode<synchronous>, transform_indices = @transform_3, window_bounds = array<i64: 512, 512>}, {pipeline_mode = #tpu.pipeline_mode<synchronous>, transform_indices = @transform_4, window_bounds = array<i64: 1, 512>}, {pipeline_mode = #tpu.pipeline_mode<synchronous>, transform_indices = @transform_5, window_bounds = array<i64: 512, 128>}, {pipeline_mode = #tpu.pipeline_mode<synchronous>, transform_indices = @transform_6, window_bounds = array<i64: 1, 128>}, {pipeline_mode = #tpu.pipeline_mode<synchronous>, transform_indices = @transform_7, window_bounds = array<i64: 128, 1>}, {pipeline_mode = #tpu.pipeline_mode<synchronous>, transform_indices = @transform_8, window_bounds = array<i64: 1, 1>}, {transform_indices = @transform_9, window_bounds = array<i64: 8, 1>}]} {
    %c0 = arith.constant 0 : index
    %c0_0 = arith.constant 0 : index
    %0 = vector.load %arg1[%c0, %c0_0] : memref<8x32xf32, #tpu.memory_space<vmem>>, vector<8x32xf32>
    %1 = arith.truncf %0 : vector<8x32xf32> to vector<8x32xbf16>
    %c0_1 = arith.constant 0 : index
    %c0_2 = arith.constant 0 : index
    %2 = vector.load %arg2[%c0_1, %c0_2] : memref<32x512xbf16, #tpu.memory_space<vmem>>, vector<32x512xbf16>
    %cst = arith.constant dense<0.000000e+00> : vector<8x512xf32>
    %3 = tpu.matmul %1, %2, %cst {dimension_numbers = #tpu.dot_dimension_numbers<[1], [0], [0], [1], [0, 0, 1, 1], [], []>} : vector<8x32xbf16>, vector<32x512xbf16>, vector<8x512xf32> -> vector<8x512xf32>
    %c0_3 = arith.constant 0 : index
    %c0_4 = arith.constant 0 : index
    %4 = vector.load %arg3[%c0_3, %c0_4] : memref<1x512xf32, #tpu.memory_space<vmem>>, vector<1x512xf32>
    %5 = vector.broadcast %4 : vector<1x512xf32> to vector<8x512xf32>
    %6 = arith.addf %3, %5 : vector<8x512xf32>
    %cst_5 = arith.constant 0.000000e+00 : f32
    %7 = vector.broadcast %cst_5 : f32 to vector<8x512xf32>
    %8 = arith.maximumf %6, %7 : vector<8x512xf32>
    %9 = arith.truncf %8 : vector<8x512xf32> to vector<8x512xbf16>
    %c0_6 = arith.constant 0 : index
    %c0_7 = arith.constant 0 : index
    %10 = vector.load %arg4[%c0_6, %c0_7] : memref<512x512xbf16, #tpu.memory_space<vmem>>, vector<512x512xbf16>
    %cst_8 = arith.constant dense<0.000000e+00> : vector<8x512xf32>
    %11 = tpu.matmul %9, %10, %cst_8 {dimension_numbers = #tpu.dot_dimension_numbers<[1], [0], [0], [1], [0, 0, 1, 1], [], []>} : vector<8x512xbf16>, vector<512x512xbf16>, vector<8x512xf32> -> vector<8x512xf32>
    %c0_9 = arith.constant 0 : index
    %c0_10 = arith.constant 0 : index
    %12 = vector.load %arg5[%c0_9, %c0_10] : memref<1x512xf32, #tpu.memory_space<vmem>>, vector<1x512xf32>
    %13 = vector.broadcast %12 : vector<1x512xf32> to vector<8x512xf32>
    %14 = arith.addf %11, %13 : vector<8x512xf32>
    %cst_11 = arith.constant 0.000000e+00 : f32
    %15 = vector.broadcast %cst_11 : f32 to vector<8x512xf32>
    %16 = arith.maximumf %14, %15 : vector<8x512xf32>
    %17 = arith.truncf %16 : vector<8x512xf32> to vector<8x512xbf16>
    %c0_12 = arith.constant 0 : index
    %c0_13 = arith.constant 0 : index
    %18 = vector.load %arg6[%c0_12, %c0_13] : memref<512x128xbf16, #tpu.memory_space<vmem>>, vector<512x128xbf16>
    %cst_14 = arith.constant dense<0.000000e+00> : vector<8x128xf32>
    %19 = tpu.matmul %17, %18, %cst_14 {dimension_numbers = #tpu.dot_dimension_numbers<[1], [0], [0], [1], [0, 0, 1, 1], [], []>} : vector<8x512xbf16>, vector<512x128xbf16>, vector<8x128xf32> -> vector<8x128xf32>
    %c0_15 = arith.constant 0 : index
    %c0_16 = arith.constant 0 : index
    %20 = vector.load %arg7[%c0_15, %c0_16] : memref<1x128xf32, #tpu.memory_space<vmem>>, vector<1x128xf32>
    %21 = vector.broadcast %20 : vector<1x128xf32> to vector<8x128xf32>
    %22 = arith.addf %19, %21 : vector<8x128xf32>
    %cst_17 = arith.constant 0.000000e+00 : f32
    %23 = vector.broadcast %cst_17 : f32 to vector<8x128xf32>
    %24 = arith.maximumf %22, %23 : vector<8x128xf32>
    %25 = arith.truncf %24 : vector<8x128xf32> to vector<8x128xbf16>
    %c0_18 = arith.constant 0 : index
    %c0_19 = arith.constant 0 : index
    %26 = vector.load %arg8[%c0_18, %c0_19] : memref<128x1xbf16, #tpu.memory_space<vmem>>, vector<128x1xbf16>
    %cst_20 = arith.constant dense<0.000000e+00> : vector<8x1xf32>
    %27 = tpu.matmul %25, %26, %cst_20 {dimension_numbers = #tpu.dot_dimension_numbers<[1], [0], [0], [1], [0, 0, 1, 1], [], []>} : vector<8x128xbf16>, vector<128x1xbf16>, vector<8x1xf32> -> vector<8x1xf32>
    %c0_21 = arith.constant 0 : index
    %c0_22 = arith.constant 0 : index
    %28 = vector.load %arg9[%c0_21, %c0_22] : memref<1x1xf32, #tpu.memory_space<vmem>>, vector<1x1xf32>
    %29 = vector.broadcast %28 : vector<1x1xf32> to vector<8x1xf32>
    %30 = arith.addf %27, %29 : vector<8x1xf32>
    %c0_23 = arith.constant 0 : index
    %c0_24 = arith.constant 0 : index
    %31 = vector.load %arg10[%c0_23, %c0_24] : memref<8x1xf32, #tpu.memory_space<vmem>>, vector<8x1xf32>
    tpu.vector_store %arg10[%c0_23, %c0_24], %30 {strides = array<i32>} : memref<8x1xf32, #tpu.memory_space<vmem>>, vector<8x1xf32>,
    return
  }
  func.func @transform_0(%arg0: i32) -> (i32, i32) {
    %c0_i32 = arith.constant 0 : i32
    %c0_i32_0 = arith.constant 0 : i32
    return %arg0, %c0_i32 : i32, i32
  }
  func.func @transform_1(%arg0: i32) -> (i32, i32) {
    %c0_i32 = arith.constant 0 : i32
    %c0_i32_0 = arith.constant 0 : i32
    %c0_i32_1 = arith.constant 0 : i32
    return %c0_i32, %c0_i32_0 : i32, i32
  }
  func.func @transform_2(%arg0: i32) -> (i32, i32) {
    %c0_i32 = arith.constant 0 : i32
    %c0_i32_0 = arith.constant 0 : i32
    %c0_i32_1 = arith.constant 0 : i32
    return %c0_i32, %c0_i32_0 : i32, i32
  }
  func.func @transform_3(%arg0: i32) -> (i32, i32) {
    %c0_i32 = arith.constant 0 : i32
    %c0_i32_0 = arith.constant 0 : i32
    %c0_i32_1 = arith.constant 0 : i32
    return %c0_i32, %c0_i32_0 : i32, i32
  }
  func.func @transform_4(%arg0: i32) -> (i32, i32) {
    %c0_i32 = arith.constant 0 : i32
    %c0_i32_0 = arith.constant 0 : i32
    %c0_i32_1 = arith.constant 0 : i32
    return %c0_i32, %c0_i32_0 : i32, i32
  }
  func.func @transform_5(%arg0: i32) -> (i32, i32) {
    %c0_i32 = arith.constant 0 : i32
    %c0_i32_0 = arith.constant 0 : i32
    %c0_i32_1 = arith.constant 0 : i32
    return %c0_i32, %c0_i32_0 : i32, i32
  }
  func.func @transform_6(%arg0: i32) -> (i32, i32) {
    %c0_i32 = arith.constant 0 : i32
    %c0_i32_0 = arith.constant 0 : i32
    %c0_i32_1 = arith.constant 0 : i32
    return %c0_i32, %c0_i32_0 : i32, i32
  }
  func.func @transform_7(%arg0: i32) -> (i32, i32) {
    %c0_i32 = arith.constant 0 : i32
    %c0_i32_0 = arith.constant 0 : i32
    %c0_i32_1 = arith.constant 0 : i32
    return %c0_i32, %c0_i32_0 : i32, i32
  }
  func.func @transform_8(%arg0: i32) -> (i32, i32) {
    %c0_i32 = arith.constant 0 : i32
    %c0_i32_0 = arith.constant 0 : i32
    %c0_i32_1 = arith.constant 0 : i32
    return %c0_i32, %c0_i32_0 : i32, i32
  }
  func.func @transform_9(%arg0: i32) -> (i32, i32) {
    %c0_i32 = arith.constant 0 : i32
    %c0_i32_0 = arith.constant 0 : i32
    return %arg0, %c0_i32 : i32, i32
  }
}

module attributes {stable_mosaic.version = 11 : i64} {
  func.func @critic_kernel(%arg0: i32, %arg1: memref<8x32xf32, #tpu.memory_space<vmem>>, %arg2: memref<32x512xbf16, #tpu.memory_space<vmem>>, %arg3: memref<1x512xf32, #tpu.memory_space<vmem>>, %arg4: memref<512x512xbf16, #tpu.memory_space<vmem>>, %arg5: memref<1x512xf32, #tpu.memory_space<vmem>>, %arg6: memref<512x128xbf16, #tpu.memory_space<vmem>>, %arg7: memref<1x128xf32, #tpu.memory_space<vmem>>, %arg8: memref<128x1xbf16, #tpu.memory_space<vmem>>, %arg9: memref<1x1xf32, #tpu.memory_space<vmem>>, %arg10: memref<8x1xf32, #tpu.memory_space<vmem>>) attributes {dimension_semantics = [#tpu.dimension_semantics<parallel>], iteration_bounds = array<i64: 1>, scalar_prefetch = 0 : i64, scratch_operands = 0 : i64, tpu.core_type = #tpu.core_type<tc>, window_params = [{transform_indices = @transform_0, window_bounds = array<i64: 8, 32>}, {pipeline_mode = #tpu.pipeline_mode<synchronous>, transform_indices = @transform_1, window_bounds = array<i64: 32, 512>}, {pipeline_mode = #tpu.pipeline_mode<synchronous>, transform_indices = @transform_2, window_bounds = array<i64: 1, 512>}, {pipeline_mode = #tpu.pipeline_mode<synchronous>, transform_indices = @transform_3, window_bounds = array<i64: 512, 512>}, {pipeline_mode = #tpu.pipeline_mode<synchronous>, transform_indices = @transform_4, window_bounds = array<i64: 1, 512>}, {pipeline_mode = #tpu.pipeline_mode<synchronous>, transform_indices = @transform_5, window_bounds = array<i64: 512, 128>}, {pipeline_mode = #tpu.pipeline_mode<synchronous>, transform_indices = @transform_6, window_bounds = array<i64: 1, 128>}, {pipeline_mode = #tpu.pipeline_mode<synchronous>, transform_indices = @transform_7, window_bounds = array<i64: 128, 1>}, {pipeline_mode = #tpu.pipeline_mode<synchronous>, transform_indices = @transform_8, window_bounds = array<i64: 1, 1>}, {transform_indices = @transform_9, window_bounds = array<i64: 8, 1>}]} {
    %c0 = arith.constant 0 : index
    %c0_0 = arith.constant 0 : index
    %0 = vector.load %arg1[%c0, %c0_0] : memref<8x32xf32, #tpu.memory_space<vmem>>, vector<8x32xf32>
    %1 = arith.truncf %0 : vector<8x32xf32> to vector<8x32xbf16>
    %c0_1 = arith.constant 0 : index
    %c0_2 = arith.constant 0 : index
    %2 = vector.load %arg2[%c0_1, %c0_2] : memref<32x512xbf16, #tpu.memory_space<vmem>>, vector<32x512xbf16>
    %cst = arith.constant dense<0.000000e+00> : vector<8x512xf32>
    %3 = tpu.matmul %1, %2, %cst {dimension_numbers = #tpu.dot_dimension_numbers<[1], [0], [0], [1], [0, 0, 1, 1], [], []>} : vector<8x32xbf16>, vector<32x512xbf16>, vector<8x512xf32> -> vector<8x512xf32>
    %c0_3 = arith.constant 0 : index
    %c0_4 = arith.constant 0 : index
    %4 = vector.load %arg3[%c0_3, %c0_4] : memref<1x512xf32, #tpu.memory_space<vmem>>, vector<1x512xf32>
    %5 = vector.broadcast %4 : vector<1x512xf32> to vector<8x512xf32>
    %6 = arith.addf %3, %5 : vector<8x512xf32>
    %cst_5 = arith.constant 0.000000e+00 : f32
    %7 = vector.broadcast %cst_5 : f32 to vector<8x512xf32>
    %8 = arith.maximumf %6, %7 : vector<8x512xf32>
    %9 = arith.truncf %8 : vector<8x512xf32> to vector<8x512xbf16>
    %c0_6 = arith.constant 0 : index
    %c0_7 = arith.constant 0 : index
    %10 = vector.load %arg4[%c0_6, %c0_7] : memref<512x512xbf16, #tpu.memory_space<vmem>>, vector<512x512xbf16>
    %cst_8 = arith.constant dense<0.000000e+00> : vector<8x512xf32>
    %11 = tpu.matmul %9, %10, %cst_8 {dimension_numbers = #tpu.dot_dimension_numbers<[1], [0], [0], [1], [0, 0, 1, 1], [], []>} : vector<8x512xbf16>, vector<512x512xbf16>, vector<8x512xf32> -> vector<8x512xf32>
    %c0_9 = arith.constant 0 : index
    %c0_10 = arith.constant 0 : index
    %12 = vector.load %arg5[%c0_9, %c0_10] : memref<1x512xf32, #tpu.memory_space<vmem>>, vector<1x512xf32>
    %13 = vector.broadcast %12 : vector<1x512xf32> to vector<8x512xf32>
    %14 = arith.addf %11, %13 : vector<8x512xf32>
    %cst_11 = arith.constant 0.000000e+00 : f32
    %15 = vector.broadcast %cst_11 : f32 to vector<8x512xf32>
    %16 = arith.maximumf %14, %15 : vector<8x512xf32>
    %17 = arith.truncf %16 : vector<8x512xf32> to vector<8x512xbf16>
    %c0_12 = arith.constant 0 : index
    %c0_13 = arith.constant 0 : index
    %18 = vector.load %arg6[%c0_12, %c0_13] : memref<512x128xbf16, #tpu.memory_space<vmem>>, vector<512x128xbf16>
    %cst_14 = arith.constant dense<0.000000e+00> : vector<8x128xf32>
    %19 = tpu.matmul %17, %18, %cst_14 {dimension_numbers = #tpu.dot_dimension_numbers<[1], [0], [0], [1], [0, 0, 1, 1], [], []>} : vector<8x512xbf16>, vector<512x128xbf16>, vector<8x128xf32> -> vector<8x128xf32>
    %c0_15 = arith.constant 0 : index
    %c0_16 = arith.constant 0 : index
    %20 = vector.load %arg7[%c0_15, %c0_16] : memref<1x128xf32, #tpu.memory_space<vmem>>, vector<1x128xf32>
    %21 = vector.broadcast %20 : vector<1x128xf32> to vector<8x128xf32>
    %22 = arith.addf %19, %21 : vector<8x128xf32>
    %cst_17 = arith.constant 0.000000e+00 : f32
    %23 = vector.broadcast %cst_17 : f32 to vector<8x128xf32>
    %24 = arith.maximumf %22, %23 : vector<8x128xf32>
    %25 = arith.truncf %24 : vector<8x128xf32> to vector<8x128xbf16>
    %c0_18 = arith.constant 0 : index
    %c0_19 = arith.constant 0 : index
    %26 = vector.load %arg8[%c0_18, %c0_19] : memref<128x1xbf16, #tpu.memory_space<vmem>>, vector<128x1xbf16>
    %cst_20 = arith.constant dense<0.000000e+00> : vector<8x1xf32>
    %27 = tpu.matmul %25, %26, %cst_20 {dimension_numbers = #tpu.dot_dimension_numbers<[1], [0], [0], [1], [0, 0, 1, 1], [], []>} : vector<8x128xbf16>, vector<128x1xbf16>, vector<8x1xf32> -> vector<8x1xf32>
    %c0_21 = arith.constant 0 : index
    %c0_22 = arith.constant 0 : index
    %28 = vector.load %arg9[%c0_21, %c0_22] : memref<1x1xf32, #tpu.memory_space<vmem>>, vector<1x1xf32>
    %29 = vector.broadcast %28 : vector<1x1xf32> to vector<8x1xf32>
    %30 = arith.addf %27, %29 : vector<8x1xf32>
    %c0_23 = arith.constant 0 : index
    %c0_24 = arith.constant 0 : index
    %31 = vector.load %arg10[%c0_23, %c0_24] : memref<8x1xf32, #tpu.memory_space<vmem>>, vector<8x1xf32>
    tpu.vector_store %arg10[%c0_23, %c0_24], %30 {strides = array<i32>} : memref<8x1xf32, #tpu.memory_space<vmem>>, vector<8x1xf32>,
    return
  }
  func.func @transform_0(%arg0: i32) -> (i32, i32) {
    %c0_i32 = arith.constant 0 : i32
    %c0_i32_0 = arith.constant 0 : i32
    return %arg0, %c0_i32 : i32, i32
  }
  func.func @transform_1(%arg0: i32) -> (i32, i32) {
    %c0_i32 = arith.constant 0 : i32
    %c0_i32_0 = arith.constant 0 : i32
    %c0_i32_1 = arith.constant 0 : i32
    return %c0_i32, %c0_i32_0 : i32, i32
  }
  func.func @transform_2(%arg0: i32) -> (i32, i32) {
    %c0_i32 = arith.constant 0 : i32
    %c0_i32_0 = arith.constant 0 : i32
    %c0_i32_1 = arith.constant 0 : i32
    return %c0_i32, %c0_i32_0 : i32, i32
  }
  func.func @transform_3(%arg0: i32) -> (i32, i32) {
    %c0_i32 = arith.constant 0 : i32
    %c0_i32_0 = arith.constant 0 : i32
    %c0_i32_1 = arith.constant 0 : i32
    return %c0_i32, %c0_i32_0 : i32, i32
  }
  func.func @transform_4(%arg0: i32) -> (i32, i32) {
    %c0_i32 = arith.constant 0 : i32
    %c0_i32_0 = arith.constant 0 : i32
    %c0_i32_1 = arith.constant 0 : i32
    return %c0_i32, %c0_i32_0 : i32, i32
  }
  func.func @transform_5(%arg0: i32) -> (i32, i32) {
    %c0_i32 = arith.constant 0 : i32
    %c0_i32_0 = arith.constant 0 : i32
    %c0_i32_1 = arith.constant 0 : i32
    return %c0_i32, %c0_i32_0 : i32, i32
  }
  func.func @transform_6(%arg0: i32) -> (i32, i32) {
    %c0_i32 = arith.constant 0 : i32
    %c0_i32_0 = arith.constant 0 : i32
    %c0_i32_1 = arith.constant 0 : i32
    return %c0_i32, %c0_i32_0 : i32, i32
  }
  func.func @transform_7(%arg0: i32) -> (i32, i32) {
    %c0_i32 = arith.constant 0 : i32
    %c0_i32_0 = arith.constant 0 : i32
    %c0_i32_1 = arith.constant 0 : i32
    return %c0_i32, %c0_i32_0 : i32, i32
  }
  func.func @transform_8(%arg0: i32) -> (i32, i32) {
    %c0_i32 = arith.constant 0 : i32
    %c0_i32_0 = arith.constant 0 : i32
    %c0_i32_1 = arith.constant 0 : i32
    return %c0_i32, %c0_i32_0 : i32, i32
  }
  func.func @transform_9(%arg0: i32) -> (i32, i32) {
    %c0_i32 = arith.constant 0 : i32
    %c0_i32_0 = arith.constant 0 : i32
    return %arg0, %c0_i32 : i32, i32
  }
}

</mosaic_0001>

<llo_original>
// kernel: _critic_forward.1
$region0: #{_critic_forward.1}
  #allocation0 [shape = 'u32[]', space=smem, size = 0x4, offset = 0x4, fixed_abs, tag = 'smem constant byte address 0x4 - core index']
  #allocation1 [shape = 'u32[72,128]{1,0:T(1,128)}', space=vmem, size = 0x9000, scoped, tag = 'internal scratch']
  #allocation2 [shape = 'f32[1,1]{1,0:T(1,128)S(1)}', space=vmem, size = 0x200, scoped, tag = 'scoped memory for _critic_forward.1']
  %s0 = inlined_call_operand.hbm [shape: f32[8,32], index: 0, kind: input, shape index: {}]
  %s1 = inlined_call_operand.vmem [shape: bf16[32,512], index: 1, kind: input, shape index: {}]
  %s2 = inlined_call_operand.vmem [shape: f32[1,512], index: 2, kind: input, shape index: {}]
  %s3 = inlined_call_operand.hbm [shape: bf16[512,512], index: 3, kind: input, shape index: {}]
  %s4 = inlined_call_operand.hbm [shape: f32[1,512], index: 4, kind: input, shape index: {}]
  %s5 = inlined_call_operand.hbm [shape: bf16[512,128], index: 5, kind: input, shape index: {}]
  %s6 = inlined_call_operand.vmem [shape: f32[1,128], index: 6, kind: input, shape index: {}]
  %s7 = inlined_call_operand.vmem [shape: bf16[128,1], index: 7, kind: input, shape index: {}]
  %s8 = inlined_call_operand.<no memory space> [shape: f32[1,1], index: 8, kind: input, shape index: {}]
  %s9 = inlined_call_operand.vmem [shape: f32[8,1], index: 9, kind: output, shape index: {}]
  %s10 = sld [smem:[#allocation0]]
  $region62: #{_critic_forward.1} parent=0
    _
  %s12 = ssub.s32 1, %s10
  %s13 = scalar_select 0, %s12, %s10
  %v14 = vstv %s8
  %15 = vst [vmem:[#allocation2] sm:$0x1] %v14
  $region1: #{_critic_forward.1} parent=0
    #allocation3 [shape = 'u8[4096]{0}', space=vmem, size = 0x1000, scoped, tag = 'input window, operand 0, single buffered']
    #allocation4 [shape = 's32[1]{0}', space=sflag, size = 0x4, scoped, tag = 'scoped memory for _critic_forward.1']
    #allocation5 [shape = 'u8[524288]{0}', space=vmem, size = 0x80000, scoped, tag = 'input window, operand 3, single buffered']
    #allocation6 [shape = 's32[1]{0}', space=sflag, size = 0x4, scoped, tag = 'scoped memory for _critic_forward.1']
    #allocation7 [shape = 'u8[2048]{0}', space=vmem, size = 0x800, scoped, tag = 'input window, operand 4, single buffered']
    #allocation8 [shape = 'u8[131072]{0}', space=vmem, size = 0x20000, scoped, tag = 'input window, operand 5, single buffered']
    #allocation9 [shape = 's32[1]{0}', space=sflag, size = 0x4, scoped, tag = 'scoped memory for _critic_forward.1']
    %16 = vsyncpa [#allocation4], 0
    %17 = vsyncpa [#allocation6], 0
    %18 = vsyncpa [#allocation9], 0
    // Predicated region
    $region2: #{_critic_forward.1} parent=1 // pred_check
      _
    $region3: #{_critic_forward.1} parent=1 // pred_check_branch
      %20 = sbr.rel (0) target = $region5
    $region4: #{_critic_forward.1} parent=1 // pred_region
      %22 = vsyncadd [#allocation4], 0
      %s24 = sshll.u32 %s0, 4
      %s25 = int_to_ptr.hbm [resolvable:$true] %s24
      %s26 = sshll.u32 [#allocation3], 4
      %s27 = int_to_ptr.vmem [resolvable:$true] %s26
      %29 = dma.hbm_to_vmem [thread:$0]  %s25, 128, %s27, [#allocation4]
    $region5: #{_critic_forward.1} parent=1 // pred_fallthru
      _
    // Predicated region
    $region6: #{_critic_forward.1} parent=1 // pred_check
      _
    $region7: #{_critic_forward.1} parent=1 // pred_check_branch
      %31 = sbr.rel (0) target = $region9
    $region8: #{_critic_forward.1} parent=1 // pred_region
      _
    $region9: #{_critic_forward.1} parent=1 // pred_fallthru
      _
    // Predicated region
    $region10: #{_critic_forward.1} parent=1 // pred_check
      _
    $region11: #{_critic_forward.1} parent=1 // pred_check_branch
      %33 = sbr.rel (0) target = $region13
    $region12: #{_critic_forward.1} parent=1 // pred_region
      _
    $region13: #{_critic_forward.1} parent=1 // pred_fallthru
      _
    // Predicated region
    $region14: #{_critic_forward.1} parent=1 // pred_check
      _
    $region15: #{_critic_forward.1} parent=1 // pred_check_branch
      %35 = sbr.rel (0) target = $region17
    $region16: #{_critic_forward.1} parent=1 // pred_region
      %37 = vsyncadd [#allocation6], 0
      %s38 = sshll.u32 %s3, 4
      %s39 = int_to_ptr.hbm [resolvable:$true] %s38
      %s40 = sshll.u32 [#allocation5], 4
      %s41 = int_to_ptr.vmem [resolvable:$true] %s40
      %46 = dma.hbm_to_vmem [thread:$0]  %s39, 16384, %s41, [#allocation6], 256, 256, 16
    $region17: #{_critic_forward.1} parent=1 // pred_fallthru
      _
    // Predicated region
    $region18: #{_critic_forward.1} parent=1 // pred_check
      _
    $region19: #{_critic_forward.1} parent=1 // pred_check_branch
      %48 = sbr.rel (0) target = $region21
    $region20: #{_critic_forward.1} parent=1 // pred_region
      %50 = vsyncadd [#allocation6], 0
      %s52 = sshll.u32 %s4, 4
      %s53 = int_to_ptr.hbm [resolvable:$true] %s52
      %s54 = sshll.u32 [#allocation7], 4
      %s55 = int_to_ptr.vmem [resolvable:$true] %s54
      %57 = dma.hbm_to_vmem [thread:$0]  %s53, 64, %s55, [#allocation6]
    $region21: #{_critic_forward.1} parent=1 // pred_fallthru
      _
    // Predicated region
    $region22: #{_critic_forward.1} parent=1 // pred_check
      _
    $region23: #{_critic_forward.1} parent=1 // pred_check_branch
      %59 = sbr.rel (0) target = $region25
    $region24: #{_critic_forward.1} parent=1 // pred_region
      %61 = vsyncadd [#allocation9], 0
      %s62 = sshll.u32 %s5, 4
      %s63 = int_to_ptr.hbm [resolvable:$true] %s62
      %s64 = sshll.u32 [#allocation8], 4
      %s65 = int_to_ptr.vmem [resolvable:$true] %s64
      %70 = dma.hbm_to_vmem [thread:$0]  %s63, 4096, %s65, [#allocation9], 64, 64, 4
    $region25: #{_critic_forward.1} parent=1 // pred_fallthru
      _
    // Predicated region
    $region26: #{_critic_forward.1} parent=1 // pred_check
      _
    $region27: #{_critic_forward.1} parent=1 // pred_check_branch
      %72 = sbr.rel (0) target = $region29
    $region28: #{_critic_forward.1} parent=1 // pred_region
      _
    $region29: #{_critic_forward.1} parent=1 // pred_fallthru
      _
    // Predicated region
    $region30: #{_critic_forward.1} parent=1 // pred_check
      _
    $region31: #{_critic_forward.1} parent=1 // pred_check_branch
      %74 = sbr.rel (0) target = $region33
    $region32: #{_critic_forward.1} parent=1 // pred_region
      _
    $region33: #{_critic_forward.1} parent=1 // pred_fallthru
      _
    // Predicated region
    $region34: #{_critic_forward.1} parent=1 // pred_check
      _
    $region35: #{_critic_forward.1} parent=1 // pred_check_branch
      %76 = sbr.rel (0) target = $region37
    $region36: #{_critic_forward.1} parent=1 // pred_region
      _
    $region37: #{_critic_forward.1} parent=1 // pred_fallthru
      _
    // Predicated region
    $region38: #{_critic_forward.1} parent=1 // pred_check
      _
    $region39: #{_critic_forward.1} parent=1 // pred_check_branch
      %78 = sbr.rel (0) target = $region41
    $region40: #{_critic_forward.1} parent=1 // pred_region
      %80 = dma.done [#allocation4], 128
    $region41: #{_critic_forward.1} parent=1 // pred_fallthru
      _
    // Predicated region
    $region42: #{_critic_forward.1} parent=1 // pred_check
      _
    $region43: #{_critic_forward.1} parent=1 // pred_check_branch
      %82 = sbr.rel (0) target = $region45
    $region44: #{_critic_forward.1} parent=1 // pred_region
      %84 = dma.done [#allocation6], 16384
    $region45: #{_critic_forward.1} parent=1 // pred_fallthru
      _
    // Predicated region
    $region46: #{_critic_forward.1} parent=1 // pred_check
      _
    $region47: #{_critic_forward.1} parent=1 // pred_check_branch
      %86 = sbr.rel (0) target = $region49
    $region48: #{_critic_forward.1} parent=1 // pred_region
      %88 = dma.done [#allocation6], 64
    $region49: #{_critic_forward.1} parent=1 // pred_fallthru
      _
    // Predicated region
    $region50: #{_critic_forward.1} parent=1 // pred_check
      _
    $region51: #{_critic_forward.1} parent=1 // pred_check_branch
      %90 = sbr.rel (0) target = $region53
    $region52: #{_critic_forward.1} parent=1 // pred_region
      %92 = dma.done [#allocation9], 4096
    $region53: #{_critic_forward.1} parent=1 // pred_fallthru
      _
    %v94 = vld [vmem:[#allocation3] sm:$0xff]
    %v95 = vpack.c.bf16 %v94, %v94
    %v96 = vld [vmem:[%s1] sm:$0xff]
    %v97 = vld [vmem:[%s1 + $0x8] sm:$0xff]
    %v98 = vld [vmem:[%s1 + $0x10] sm:$0xff]
    %v99 = vld [vmem:[%s1 + $0x18] sm:$0xff]
    %v100 = vld [vmem:[%s1 + $0x20] sm:$0xff]
    %v101 = vld [vmem:[%s1 + $0x28] sm:$0xff]
    %v102 = vld [vmem:[%s1 + $0x30] sm:$0xff]
    %v103 = vld [vmem:[%s1 + $0x38] sm:$0xff]
    %v104 = vld [vmem:[%s2] sm:$0xf]
    %v106 = vperm.slane %v104, 0
    %v107 = vperm.slane %v104, 1
    %v108 = vperm.slane %v104, 2
    %v109 = vperm.slane %v104, 3
    %v122 = vunpack.c.l.b16 %v96
    %v123 = vunpack.c.h.b16 %v96
    %v124 = vunpack.c.l.b16 %v97
    %v125 = vunpack.c.h.b16 %v97
    %v126 = vunpack.c.l.b16 %v98
    %v127 = vunpack.c.h.b16 %v98
    %v128 = vunpack.c.l.b16 %v99
    %v129 = vunpack.c.h.b16 %v99
    %v130 = vunpack.c.l.b16 %v100
    %v131 = vunpack.c.h.b16 %v100
    %v132 = vunpack.c.l.b16 %v101
    %v133 = vunpack.c.h.b16 %v101
    %v134 = vunpack.c.l.b16 %v102
    %v135 = vunpack.c.h.b16 %v102
    %v136 = vunpack.c.l.b16 %v103
    %v137 = vunpack.c.h.b16 %v103
    %v138 = vpack.c.b16 %v126, %v122
    %v139 = vpack.c.b16 %v127, %v123
    %v140 = vpack.c.b16 %v128, %v124
    %v141 = vpack.c.b16 %v129, %v125
    %v142 = vpack.c.b16 %v134, %v130
    %v143 = vpack.c.b16 %v135, %v131
    %v144 = vpack.c.b16 %v136, %v132
    %v145 = vpack.c.b16 %v137, %v133
    %vm154 = vcmask 261120
    %v156 = vsel %vm154, %v95, 0
    %158 = vmatpush.bf16.msra.mxu0 0
    %159 = vmatpush.bf16.msra.mxu0 0
    %160 = vmatpush.bf16.msra.mxu0 0
    %161 = vmatpush.bf16.msra.mxu0 0
    %162 = vmatpush.bf16.msra.mxu0 0
    %163 = vmatpush.bf16.msra.mxu0 0
    %164 = vmatpush.bf16.msra.mxu0 %v142
    %165 = vmatpush.bf16.msra.mxu0 %v138
    %166 = vmatmul.bf16.gmra.mxu0 %v156
    %v167 = vpop.f32.mrf.mxu0
    %v168 = vadd.f32 %v106, %v167
    %v169 = vpop.f32.mrf.mxu0
    %170 = vdwg.mxu0
    %171 = vmatpush.bf16.msra.mxu0 0
    %172 = vmatpush.bf16.msra.mxu0 0
    %173 = vmatpush.bf16.msra.mxu0 0
    %174 = vmatpush.bf16.msra.mxu0 0
    %175 = vmatpush.bf16.msra.mxu0 0
    %176 = vmatpush.bf16.msra.mxu0 0
    %177 = vmatpush.bf16.msra.mxu0 %v143
    %178 = vmatpush.bf16.msra.mxu0 %v139
    %179 = vmatmul.bf16.gmra.mxu0 %v156
    %v180 = vpop.f32.mrf.mxu0
    %v181 = vadd.f32 %v107, %v180
    %v182 = vpop.f32.mrf.mxu0
    %183 = vdwg.mxu0
    %184 = vmatpush.bf16.msra.mxu0 0
    %185 = vmatpush.bf16.msra.mxu0 0
    %186 = vmatpush.bf16.msra.mxu0 0
    %187 = vmatpush.bf16.msra.mxu0 0
    %188 = vmatpush.bf16.msra.mxu0 0
    %189 = vmatpush.bf16.msra.mxu0 0
    %190 = vmatpush.bf16.msra.mxu0 %v144
    %191 = vmatpush.bf16.msra.mxu0 %v140
    %192 = vmatmul.bf16.gmra.mxu0 %v156
    %v193 = vpop.f32.mrf.mxu0
    %v194 = vadd.f32 %v108, %v193
    %v195 = vpop.f32.mrf.mxu0
    %196 = vdwg.mxu0
    %197 = vmatpush.bf16.msra.mxu0 0
    %198 = vmatpush.bf16.msra.mxu0 0
    %199 = vmatpush.bf16.msra.mxu0 0
    %200 = vmatpush.bf16.msra.mxu0 0
    %201 = vmatpush.bf16.msra.mxu0 0
    %202 = vmatpush.bf16.msra.mxu0 0
    %203 = vmatpush.bf16.msra.mxu0 %v145
    %204 = vmatpush.bf16.msra.mxu0 %v141
    %205 = vmatmul.bf16.gmra.mxu0 %v156
    %v206 = vpop.f32.mrf.mxu0
    %v207 = vadd.f32 %v109, %v206
    %v208 = vpop.f32.mrf.mxu0
    %209 = vdwg.mxu0
    %v210 = vmax.f32 %v168, 0.0
    %v211 = vmax.f32 %v181, 0.0
    %v212 = vmax.f32 %v194, 0.0
    %v213 = vmax.f32 %v207, 0.0
    %v214 = vpack.c.bf16 %v210, %v210
    %v215 = vpack.c.bf16 %v211, %v211
    %v216 = vpack.c.bf16 %v212, %v212
    %v217 = vpack.c.bf16 %v213, %v213
    %v218 = vld [vmem:[#allocation5] sm:$0xff]
    %v219 = vld [vmem:[#allocation5 + $0x8] sm:$0xff]
    %v220 = vld [vmem:[#allocation5 + $0x10] sm:$0xff]
    %v221 = vld [vmem:[#allocation5 + $0x18] sm:$0xff]
    %v222 = vld [vmem:[#allocation5 + $0x20] sm:$0xff]
    %v223 = vld [vmem:[#allocation5 + $0x28] sm:$0xff]
    %v224 = vld [vmem:[#allocation5 + $0x30] sm:$0xff]
    %v225 = vld [vmem:[#allocation5 + $0x38] sm:$0xff]
    %v226 = vld [vmem:[#allocation5 + $0x40] sm:$0xff]
    %v227 = vld [vmem:[#allocation5 + $0x48] sm:$0xff]
    %v228 = vld [vmem:[#allocation5 + $0x50] sm:$0xff]
    %v229 = vld [vmem:[#allocation5 + $0x58] sm:$0xff]
    %v230 = vld [vmem:[#allocation5 + $0x60] sm:$0xff]
    %v231 = vld [vmem:[#allocation5 + $0x68] sm:$0xff]
    %v232 = vld [vmem:[#allocation5 + $0x70] sm:$0xff]
    %v233 = vld [vmem:[#allocation5 + $0x78] sm:$0xff]
    %v234 = vld [vmem:[#allocation5 + $0x80] sm:$0xff]
    %v235 = vld [vmem:[#allocation5 + $0x88] sm:$0xff]
    %v236 = vld [vmem:[#allocation5 + $0x90] sm:$0xff]
    %v237 = vld [vmem:[#allocation5 + $0x98] sm:$0xff]
    %v238 = vld [vmem:[#allocation5 + $0xa0] sm:$0xff]
    %v239 = vld [vmem:[#allocation5 + $0xa8] sm:$0xff]
    %v240 = vld [vmem:[#allocation5 + $0xb0] sm:$0xff]
    %v241 = vld [vmem:[#allocation5 + $0xb8] sm:$0xff]
    %v242 = vld [vmem:[#allocation5 + $0xc0] sm:$0xff]
    %v243 = vld [vmem:[#allocation5 + $0xc8] sm:$0xff]
    %v244 = vld [vmem:[#allocation5 + $0xd0] sm:$0xff]
    %v245 = vld [vmem:[#allocation5 + $0xd8] sm:$0xff]
    %v246 = vld [vmem:[#allocation5 + $0xe0] sm:$0xff]
    %v247 = vld [vmem:[#allocation5 + $0xe8] sm:$0xff]
    %v248 = vld [vmem:[#allocation5 + $0xf0] sm:$0xff]
    %v249 = vld [vmem:[#allocation5 + $0xf8] sm:$0xff]
    %v250 = vld [vmem:[#allocation5 + $0x100] sm:$0xff]
    %v251 = vld [vmem:[#allocation5 + $0x108] sm:$0xff]
    %v252 = vld [vmem:[#allocation5 + $0x110] sm:$0xff]
    %v253 = vld [vmem:[#allocation5 + $0x118] sm:$0xff]
    %v254 = vld [vmem:[#allocation5 + $0x120] sm:$0xff]
    %v255 = vld [vmem:[#allocation5 + $0x128] sm:$0xff]
    %v256 = vld [vmem:[#allocation5 + $0x130] sm:$0xff]
    %v257 = vld [vmem:[#allocation5 + $0x138] sm:$0xff]
    %v258 = vld [vmem:[#allocation5 + $0x140] sm:$0xff]
    %v259 = vld [vmem:[#allocation5 + $0x148] sm:$0xff]
    %v260 = vld [vmem:[#allocation5 + $0x150] sm:$0xff]
    %v261 = vld [vmem:[#allocation5 + $0x158] sm:$0xff]
    %v262 = vld [vmem:[#allocation5 + $0x160] sm:$0xff]
    %v263 = vld [vmem:[#allocation5 + $0x168] sm:$0xff]
    %v264 = vld [vmem:[#allocation5 + $0x170] sm:$0xff]
    %v265 = vld [vmem:[#allocation5 + $0x178] sm:$0xff]
    %v266 = vld [vmem:[#allocation5 + $0x180] sm:$0xff]
    %v267 = vld [vmem:[#allocation5 + $0x188] sm:$0xff]
    %v268 = vld [vmem:[#allocation5 + $0x190] sm:$0xff]
    %v269 = vld [vmem:[#allocation5 + $0x198] sm:$0xff]
    %v270 = vld [vmem:[#allocation5 + $0x1a0] sm:$0xff]
    %v271 = vld [vmem:[#allocation5 + $0x1a8] sm:$0xff]
    %v272 = vld [vmem:[#allocation5 + $0x1b0] sm:$0xff]
    %v273 = vld [vmem:[#allocation5 + $0x1b8] sm:$0xff]
    %v274 = vld [vmem:[#allocation5 + $0x1c0] sm:$0xff]
    %v275 = vld [vmem:[#allocation5 + $0x1c8] sm:$0xff]
    %v276 = vld [vmem:[#allocation5 + $0x1d0] sm:$0xff]
    %v277 = vld [vmem:[#allocation5 + $0x1d8] sm:$0xff]
    %v278 = vld [vmem:[#allocation5 + $0x1e0] sm:$0xff]
    %v279 = vld [vmem:[#allocation5 + $0x1e8] sm:$0xff]
    %v280 = vld [vmem:[#allocation5 + $0x1f0] sm:$0xff]
    %v281 = vld [vmem:[#allocation5 + $0x1f8] sm:$0xff]
    %v282 = vld [vmem:[#allocation5 + $0x200] sm:$0xff]
    %v283 = vld [vmem:[#allocation5 + $0x208] sm:$0xff]
    %v284 = vld [vmem:[#allocation5 + $0x210] sm:$0xff]
    %v285 = vld [vmem:[#allocation5 + $0x218] sm:$0xff]
    %v286 = vld [vmem:[#allocation5 + $0x220] sm:$0xff]
    %v287 = vld [vmem:[#allocation5 + $0x228] sm:$0xff]
    %v288 = vld [vmem:[#allocation5 + $0x230] sm:$0xff]
    %v289 = vld [vmem:[#allocation5 + $0x238] sm:$0xff]
    %v290 = vld [vmem:[#allocation5 + $0x240] sm:$0xff]
    %v291 = vld [vmem:[#allocation5 + $0x248] sm:$0xff]
    %v292 = vld [vmem:[#allocation5 + $0x250] sm:$0xff]
    %v293 = vld [vmem:[#allocation5 + $0x258] sm:$0xff]
    %v294 = vld [vmem:[#allocation5 + $0x260] sm:$0xff]
    %v295 = vld [vmem:[#allocation5 + $0x268] sm:$0xff]
    %v296 = vld [vmem:[#allocation5 + $0x270] sm:$0xff]
    %v297 = vld [vmem:[#allocation5 + $0x278] sm:$0xff]
    %v298 = vld [vmem:[#allocation5 + $0x280] sm:$0xff]
    %v299 = vld [vmem:[#allocation5 + $0x288] sm:$0xff]
    %v300 = vld [vmem:[#allocation5 + $0x290] sm:$0xff]
    %v301 = vld [vmem:[#allocation5 + $0x298] sm:$0xff]
    %v302 = vld [vmem:[#allocation5 + $0x2a0] sm:$0xff]
    %v303 = vld [vmem:[#allocation5 + $0x2a8] sm:$0xff]
    %v304 = vld [vmem:[#allocation5 + $0x2b0] sm:$0xff]
    %v305 = vld [vmem:[#allocation5 + $0x2b8] sm:$0xff]
    %v306 = vld [vmem:[#allocation5 + $0x2c0] sm:$0xff]
    %v307 = vld [vmem:[#allocation5 + $0x2c8] sm:$0xff]
    %v308 = vld [vmem:[#allocation5 + $0x2d0] sm:$0xff]
    %v309 = vld [vmem:[#allocation5 + $0x2d8] sm:$0xff]
    %v310 = vld [vmem:[#allocation5 + $0x2e0] sm:$0xff]
    %v311 = vld [vmem:[#allocation5 + $0x2e8] sm:$0xff]
    %v312 = vld [vmem:[#allocation5 + $0x2f0] sm:$0xff]
    %v313 = vld [vmem:[#allocation5 + $0x2f8] sm:$0xff]
    %v314 = vld [vmem:[#allocation5 + $0x300] sm:$0xff]
    %v315 = vld [vmem:[#allocation5 + $0x308] sm:$0xff]
    %v316 = vld [vmem:[#allocation5 + $0x310] sm:$0xff]
    %v317 = vld [vmem:[#allocation5 + $0x318] sm:$0xff]
    %v318 = vld [vmem:[#allocation5 + $0x320] sm:$0xff]
    %v319 = vld [vmem:[#allocation5 + $0x328] sm:$0xff]
    %v320 = vld [vmem:[#allocation5 + $0x330] sm:$0xff]
    %v321 = vld [vmem:[#allocation5 + $0x338] sm:$0xff]
    %v322 = vld [vmem:[#allocation5 + $0x340] sm:$0xff]
    %v323 = vld [vmem:[#allocation5 + $0x348] sm:$0xff]
    %v324 = vld [vmem:[#allocation5 + $0x350] sm:$0xff]
    %v325 = vld [vmem:[#allocation5 + $0x358] sm:$0xff]
    %v326 = vld [vmem:[#allocation5 + $0x360] sm:$0xff]
    %v327 = vld [vmem:[#allocation5 + $0x368] sm:$0xff]
    %v328 = vld [vmem:[#allocation5 + $0x370] sm:$0xff]
    %v329 = vld [vmem:[#allocation5 + $0x378] sm:$0xff]
    %v330 = vld [vmem:[#allocation5 + $0x380] sm:$0xff]
    %v331 = vld [vmem:[#allocation5 + $0x388] sm:$0xff]
    %v332 = vld [vmem:[#allocation5 + $0x390] sm:$0xff]
    %v333 = vld [vmem:[#allocation5 + $0x398] sm:$0xff]
    %v334 = vld [vmem:[#allocation5 + $0x3a0] sm:$0xff]
    %v335 = vld [vmem:[#allocation5 + $0x3a8] sm:$0xff]
    %v336 = vld [vmem:[#allocation5 + $0x3b0] sm:$0xff]
    %v337 = vld [vmem:[#allocation5 + $0x3b8] sm:$0xff]
    %v338 = vld [vmem:[#allocation5 + $0x3c0] sm:$0xff]
    %v339 = vld [vmem:[#allocation5 + $0x3c8] sm:$0xff]
    %v340 = vld [vmem:[#allocation5 + $0x3d0] sm:$0xff]
    %v341 = vld [vmem:[#allocation5 + $0x3d8] sm:$0xff]
    %v342 = vld [vmem:[#allocation5 + $0x3e0] sm:$0xff]
    %v343 = vld [vmem:[#allocation5 + $0x3e8] sm:$0xff]
    %v344 = vld [vmem:[#allocation5 + $0x3f0] sm:$0xff]
    %v345 = vld [vmem:[#allocation5 + $0x3f8] sm:$0xff]
    %v346 = vld [vmem:[#allocation7] sm:$0xf]
    %v348 = vperm.slane %v346, 0
    %v349 = vperm.slane %v346, 1
    %v350 = vperm.slane %v346, 2
    %v351 = vperm.slane %v346, 3
    %v484 = vunpack.c.l.b16 %v218
    %v485 = vunpack.c.h.b16 %v218
    %v486 = vunpack.c.l.b16 %v219
    %v487 = vunpack.c.h.b16 %v219
    %v488 = vunpack.c.l.b16 %v220
    %v489 = vunpack.c.h.b16 %v220
    %v490 = vunpack.c.l.b16 %v221
    %v491 = vunpack.c.h.b16 %v221
    %v492 = vunpack.c.l.b16 %v222
    %v493 = vunpack.c.h.b16 %v222
    %v494 = vunpack.c.l.b16 %v223
    %v495 = vunpack.c.h.b16 %v223
    %v496 = vunpack.c.l.b16 %v224
    %v497 = vunpack.c.h.b16 %v224
    %v498 = vunpack.c.l.b16 %v225
    %v499 = vunpack.c.h.b16 %v225
    %v500 = vunpack.c.l.b16 %v226
    %v501 = vunpack.c.h.b16 %v226
    %v502 = vunpack.c.l.b16 %v227
    %v503 = vunpack.c.h.b16 %v227
    %v504 = vunpack.c.l.b16 %v228
    %v505 = vunpack.c.h.b16 %v228
    %v506 = vunpack.c.l.b16 %v229
    %v507 = vunpack.c.h.b16 %v229
    %v508 = vunpack.c.l.b16 %v230
    %v509 = vunpack.c.h.b16 %v230
    %v510 = vunpack.c.l.b16 %v231
    %v511 = vunpack.c.h.b16 %v231
    %v512 = vunpack.c.l.b16 %v232
    %v513 = vunpack.c.h.b16 %v232
    %v514 = vunpack.c.l.b16 %v233
    %v515 = vunpack.c.h.b16 %v233
    %v516 = vunpack.c.l.b16 %v234
    %v517 = vunpack.c.h.b16 %v234
    %v518 = vunpack.c.l.b16 %v235
    %v519 = vunpack.c.h.b16 %v235
    %v520 = vunpack.c.l.b16 %v236
    %v521 = vunpack.c.h.b16 %v236
    %v522 = vunpack.c.l.b16 %v237
    %v523 = vunpack.c.h.b16 %v237
    %v524 = vunpack.c.l.b16 %v238
    %v525 = vunpack.c.h.b16 %v238
    %v526 = vunpack.c.l.b16 %v239
    %v527 = vunpack.c.h.b16 %v239
    %v528 = vunpack.c.l.b16 %v240
    %v529 = vunpack.c.h.b16 %v240
    %v530 = vunpack.c.l.b16 %v241
    %v531 = vunpack.c.h.b16 %v241
    %v532 = vunpack.c.l.b16 %v242
    %v533 = vunpack.c.h.b16 %v242
    %v534 = vunpack.c.l.b16 %v243
    %v535 = vunpack.c.h.b16 %v243
    %v536 = vunpack.c.l.b16 %v244
    %v537 = vunpack.c.h.b16 %v244
    %v538 = vunpack.c.l.b16 %v245
    %v539 = vunpack.c.h.b16 %v245
    %v540 = vunpack.c.l.b16 %v246
    %v541 = vunpack.c.h.b16 %v246
    %v542 = vunpack.c.l.b16 %v247
    %v543 = vunpack.c.h.b16 %v247
    %v544 = vunpack.c.l.b16 %v248
    %v545 = vunpack.c.h.b16 %v248
    %v546 = vunpack.c.l.b16 %v249
    %v547 = vunpack.c.h.b16 %v249
    %v548 = vunpack.c.l.b16 %v250
    %v549 = vunpack.c.h.b16 %v250
    %v550 = vunpack.c.l.b16 %v251
    %v551 = vunpack.c.h.b16 %v251
    %v552 = vunpack.c.l.b16 %v252
    %v553 = vunpack.c.h.b16 %v252
    %v554 = vunpack.c.l.b16 %v253
    %v555 = vunpack.c.h.b16 %v253
    %v556 = vunpack.c.l.b16 %v254
    %v557 = vunpack.c.h.b16 %v254
    %v558 = vunpack.c.l.b16 %v255
    %v559 = vunpack.c.h.b16 %v255
    %v560 = vunpack.c.l.b16 %v256
    %v561 = vunpack.c.h.b16 %v256
    %v562 = vunpack.c.l.b16 %v257
    %v563 = vunpack.c.h.b16 %v257
    %v564 = vunpack.c.l.b16 %v258
    %v565 = vunpack.c.h.b16 %v258
    %v566 = vunpack.c.l.b16 %v259
    %v567 = vunpack.c.h.b16 %v259
    %v568 = vunpack.c.l.b16 %v260
    %v569 = vunpack.c.h.b16 %v260
    %v570 = vunpack.c.l.b16 %v261
    %v571 = vunpack.c.h.b16 %v261
    %v572 = vunpack.c.l.b16 %v262
    %v573 = vunpack.c.h.b16 %v262
    %v574 = vunpack.c.l.b16 %v263
    %v575 = vunpack.c.h.b16 %v263
    %v576 = vunpack.c.l.b16 %v264
    %v577 = vunpack.c.h.b16 %v264
    %v578 = vunpack.c.l.b16 %v265
    %v579 = vunpack.c.h.b16 %v265
    %v580 = vunpack.c.l.b16 %v266
    %v581 = vunpack.c.h.b16 %v266
    %v582 = vunpack.c.l.b16 %v267
    %v583 = vunpack.c.h.b16 %v267
    %v584 = vunpack.c.l.b16 %v268
    %v585 = vunpack.c.h.b16 %v268
    %v586 = vunpack.c.l.b16 %v269
    %v587 = vunpack.c.h.b16 %v269
    %v588 = vunpack.c.l.b16 %v270
    %v589 = vunpack.c.h.b16 %v270
    %v590 = vunpack.c.l.b16 %v271
    %v591 = vunpack.c.h.b16 %v271
    %v592 = vunpack.c.l.b16 %v272
    %v593 = vunpack.c.h.b16 %v272
    %v594 = vunpack.c.l.b16 %v273
    %v595 = vunpack.c.h.b16 %v273
    %v596 = vunpack.c.l.b16 %v274
    %v597 = vunpack.c.h.b16 %v274
    %v598 = vunpack.c.l.b16 %v275
    %v599 = vunpack.c.h.b16 %v275
    %v600 = vunpack.c.l.b16 %v276
    %v601 = vunpack.c.h.b16 %v276
    %v602 = vunpack.c.l.b16 %v277
    %v603 = vunpack.c.h.b16 %v277
    %v604 = vunpack.c.l.b16 %v278
    %v605 = vunpack.c.h.b16 %v278
    %v606 = vunpack.c.l.b16 %v279
    %v607 = vunpack.c.h.b16 %v279
    %v608 = vunpack.c.l.b16 %v280
    %v609 = vunpack.c.h.b16 %v280
    %v610 = vunpack.c.l.b16 %v281
    %v611 = vunpack.c.h.b16 %v281
    %v612 = vunpack.c.l.b16 %v282
    %v613 = vunpack.c.h.b16 %v282
    %v614 = vunpack.c.l.b16 %v283
    %v615 = vunpack.c.h.b16 %v283
    %v616 = vunpack.c.l.b16 %v284
    %v617 = vunpack.c.h.b16 %v284
    %v618 = vunpack.c.l.b16 %v285
    %v619 = vunpack.c.h.b16 %v285
    %v620 = vunpack.c.l.b16 %v286
    %v621 = vunpack.c.h.b16 %v286
    %v622 = vunpack.c.l.b16 %v287
    %v623 = vunpack.c.h.b16 %v287
    %v624 = vunpack.c.l.b16 %v288
    %v625 = vunpack.c.h.b16 %v288
    %v626 = vunpack.c.l.b16 %v289
    %v627 = vunpack.c.h.b16 %v289
    %v628 = vunpack.c.l.b16 %v290
    %v629 = vunpack.c.h.b16 %v290
    %v630 = vunpack.c.l.b16 %v291
    %v631 = vunpack.c.h.b16 %v291
    %v632 = vunpack.c.l.b16 %v292
    %v633 = vunpack.c.h.b16 %v292
    %v634 = vunpack.c.l.b16 %v293
    %v635 = vunpack.c.h.b16 %v293
    %v636 = vunpack.c.l.b16 %v294
    %v637 = vunpack.c.h.b16 %v294
    %v638 = vunpack.c.l.b16 %v295
    %v639 = vunpack.c.h.b16 %v295
    %v640 = vunpack.c.l.b16 %v296
    %v641 = vunpack.c.h.b16 %v296
    %v642 = vunpack.c.l.b16 %v297
    %v643 = vunpack.c.h.b16 %v297
    %v644 = vunpack.c.l.b16 %v298
    %v645 = vunpack.c.h.b16 %v298
    %v646 = vunpack.c.l.b16 %v299
    %v647 = vunpack.c.h.b16 %v299
    %v648 = vunpack.c.l.b16 %v300
    %v649 = vunpack.c.h.b16 %v300
    %v650 = vunpack.c.l.b16 %v301
    %v651 = vunpack.c.h.b16 %v301
    %v652 = vunpack.c.l.b16 %v302
    %v653 = vunpack.c.h.b16 %v302
    %v654 = vunpack.c.l.b16 %v303
    %v655 = vunpack.c.h.b16 %v303
    %v656 = vunpack.c.l.b16 %v304
    %v657 = vunpack.c.h.b16 %v304
    %v658 = vunpack.c.l.b16 %v305
    %v659 = vunpack.c.h.b16 %v305
    %v660 = vunpack.c.l.b16 %v306
    %v661 = vunpack.c.h.b16 %v306
    %v662 = vunpack.c.l.b16 %v307
    %v663 = vunpack.c.h.b16 %v307
    %v664 = vunpack.c.l.b16 %v308
    %v665 = vunpack.c.h.b16 %v308
    %v666 = vunpack.c.l.b16 %v309
    %v667 = vunpack.c.h.b16 %v309
    %v668 = vunpack.c.l.b16 %v310
    %v669 = vunpack.c.h.b16 %v310
    %v670 = vunpack.c.l.b16 %v311
    %v671 = vunpack.c.h.b16 %v311
    %v672 = vunpack.c.l.b16 %v312
    %v673 = vunpack.c.h.b16 %v312
    %v674 = vunpack.c.l.b16 %v313
    %v675 = vunpack.c.h.b16 %v313
    %v676 = vunpack.c.l.b16 %v314
    %v677 = vunpack.c.h.b16 %v314
    %v678 = vunpack.c.l.b16 %v315
    %v679 = vunpack.c.h.b16 %v315
    %v680 = vunpack.c.l.b16 %v316
    %v681 = vunpack.c.h.b16 %v316
    %v682 = vunpack.c.l.b16 %v317
    %v683 = vunpack.c.h.b16 %v317
    %v684 = vunpack.c.l.b16 %v318
    %v685 = vunpack.c.h.b16 %v318
    %v686 = vunpack.c.l.b16 %v319
    %v687 = vunpack.c.h.b16 %v319
    %v688 = vunpack.c.l.b16 %v320
    %v689 = vunpack.c.h.b16 %v320
    %v690 = vunpack.c.l.b16 %v321
    %v691 = vunpack.c.h.b16 %v321
    %v692 = vunpack.c.l.b16 %v322
    %v693 = vunpack.c.h.b16 %v322
    %v694 = vunpack.c.l.b16 %v323
    %v695 = vunpack.c.h.b16 %v323
    %v696 = vunpack.c.l.b16 %v324
    %v697 = vunpack.c.h.b16 %v324
    %v698 = vunpack.c.l.b16 %v325
    %v699 = vunpack.c.h.b16 %v325
    %v700 = vunpack.c.l.b16 %v326
    %v701 = vunpack.c.h.b16 %v326
    %v702 = vunpack.c.l.b16 %v327
    %v703 = vunpack.c.h.b16 %v327
    %v704 = vunpack.c.l.b16 %v328
    %v705 = vunpack.c.h.b16 %v328
    %v706 = vunpack.c.l.b16 %v329
    %v707 = vunpack.c.h.b16 %v329
    %v708 = vunpack.c.l.b16 %v330
    %v709 = vunpack.c.h.b16 %v330
    %v710 = vunpack.c.l.b16 %v331
    %v711 = vunpack.c.h.b16 %v331
    %v712 = vunpack.c.l.b16 %v332
    %v713 = vunpack.c.h.b16 %v332
    %v714 = vunpack.c.l.b16 %v333
    %v715 = vunpack.c.h.b16 %v333
    %v716 = vunpack.c.l.b16 %v334
    %v717 = vunpack.c.h.b16 %v334
    %v718 = vunpack.c.l.b16 %v335
    %v719 = vunpack.c.h.b16 %v335
    %v720 = vunpack.c.l.b16 %v336
    %v721 = vunpack.c.h.b16 %v336
    %v722 = vunpack.c.l.b16 %v337
    %v723 = vunpack.c.h.b16 %v337
    %v724 = vunpack.c.l.b16 %v338
    %v725 = vunpack.c.h.b16 %v338
    %v726 = vunpack.c.l.b16 %v339
    %v727 = vunpack.c.h.b16 %v339
    %v728 = vunpack.c.l.b16 %v340
    %v729 = vunpack.c.h.b16 %v340
    %v730 = vunpack.c.l.b16 %v341
    %v731 = vunpack.c.h.b16 %v341
    %v732 = vunpack.c.l.b16 %v342
    %v733 = vunpack.c.h.b16 %v342
    %v734 = vunpack.c.l.b16 %v343
    %v735 = vunpack.c.h.b16 %v343
    %v736 = vunpack.c.l.b16 %v344
    %v737 = vunpack.c.h.b16 %v344
    %v738 = vunpack.c.l.b16 %v345
    %v739 = vunpack.c.h.b16 %v345
    %v740 = vpack.c.b16 %v488, %v484
    %v741 = vpack.c.b16 %v489, %v485
    %v742 = vpack.c.b16 %v490, %v486
    %v743 = vpack.c.b16 %v491, %v487
    %v744 = vpack.c.b16 %v496, %v492
    %v745 = vpack.c.b16 %v497, %v493
    %v746 = vpack.c.b16 %v498, %v494
    %v747 = vpack.c.b16 %v499, %v495
    %v748 = vpack.c.b16 %v504, %v500
    %v749 = vpack.c.b16 %v505, %v501
    %v750 = vpack.c.b16 %v506, %v502
    %v751 = vpack.c.b16 %v507, %v503
    %v752 = vpack.c.b16 %v512, %v508
    %v753 = vpack.c.b16 %v513, %v509
    %v754 = vpack.c.b16 %v514, %v510
    %v755 = vpack.c.b16 %v515, %v511
    %v756 = vpack.c.b16 %v520, %v516
    %v757 = vpack.c.b16 %v521, %v517
    %v758 = vpack.c.b16 %v522, %v518
    %v759 = vpack.c.b16 %v523, %v519
    %v760 = vpack.c.b16 %v528, %v524
    %v761 = vpack.c.b16 %v529, %v525
    %v762 = vpack.c.b16 %v530, %v526
    %v763 = vpack.c.b16 %v531, %v527
    %v764 = vpack.c.b16 %v536, %v532
    %v765 = vpack.c.b16 %v537, %v533
    %v766 = vpack.c.b16 %v538, %v534
    %v767 = vpack.c.b16 %v539, %v535
    %v768 = vpack.c.b16 %v544, %v540
    %v769 = vpack.c.b16 %v545, %v541
    %v770 = vpack.c.b16 %v546, %v542
    %v771 = vpack.c.b16 %v547, %v543
    %v772 = vpack.c.b16 %v552, %v548
    %v773 = vpack.c.b16 %v553, %v549
    %v774 = vpack.c.b16 %v554, %v550
    %v775 = vpack.c.b16 %v555, %v551
    %v776 = vpack.c.b16 %v560, %v556
    %v777 = vpack.c.b16 %v561, %v557
    %v778 = vpack.c.b16 %v562, %v558
    %v779 = vpack.c.b16 %v563, %v559
    %v780 = vpack.c.b16 %v568, %v564
    %v781 = vpack.c.b16 %v569, %v565
    %v782 = vpack.c.b16 %v570, %v566
    %v783 = vpack.c.b16 %v571, %v567
    %v784 = vpack.c.b16 %v576, %v572
    %v785 = vpack.c.b16 %v577, %v573
    %v786 = vpack.c.b16 %v578, %v574
    %v787 = vpack.c.b16 %v579, %v575
    %v788 = vpack.c.b16 %v584, %v580
    %v789 = vpack.c.b16 %v585, %v581
    %v790 = vpack.c.b16 %v586, %v582
    %v791 = vpack.c.b16 %v587, %v583
    %v792 = vpack.c.b16 %v592, %v588
    %v793 = vpack.c.b16 %v593, %v589
    %v794 = vpack.c.b16 %v594, %v590
    %v795 = vpack.c.b16 %v595, %v591
    %v796 = vpack.c.b16 %v600, %v596
    %v797 = vpack.c.b16 %v601, %v597
    %v798 = vpack.c.b16 %v602, %v598
    %v799 = vpack.c.b16 %v603, %v599
    %v800 = vpack.c.b16 %v608, %v604
    %v801 = vpack.c.b16 %v609, %v605
    %v802 = vpack.c.b16 %v610, %v606
    %v803 = vpack.c.b16 %v611, %v607
    %v804 = vpack.c.b16 %v616, %v612
    %v805 = vpack.c.b16 %v617, %v613
    %v806 = vpack.c.b16 %v618, %v614
    %v807 = vpack.c.b16 %v619, %v615
    %v808 = vpack.c.b16 %v624, %v620
    %v809 = vpack.c.b16 %v625, %v621
    %v810 = vpack.c.b16 %v626, %v622
    %v811 = vpack.c.b16 %v627, %v623
    %v812 = vpack.c.b16 %v632, %v628
    %v813 = vpack.c.b16 %v633, %v629
    %v814 = vpack.c.b16 %v634, %v630
    %v815 = vpack.c.b16 %v635, %v631
    %v816 = vpack.c.b16 %v640, %v636
    %v817 = vpack.c.b16 %v641, %v637
    %v818 = vpack.c.b16 %v642, %v638
    %v819 = vpack.c.b16 %v643, %v639
    %v820 = vpack.c.b16 %v648, %v644
    %v821 = vpack.c.b16 %v649, %v645
    %v822 = vpack.c.b16 %v650, %v646
    %v823 = vpack.c.b16 %v651, %v647
    %v824 = vpack.c.b16 %v656, %v652
    %v825 = vpack.c.b16 %v657, %v653
    %v826 = vpack.c.b16 %v658, %v654
    %v827 = vpack.c.b16 %v659, %v655
    %v828 = vpack.c.b16 %v664, %v660
    %v829 = vpack.c.b16 %v665, %v661
    %v830 = vpack.c.b16 %v666, %v662
    %v831 = vpack.c.b16 %v667, %v663
    %v832 = vpack.c.b16 %v672, %v668
    %v833 = vpack.c.b16 %v673, %v669
    %v834 = vpack.c.b16 %v674, %v670
    %v835 = vpack.c.b16 %v675, %v671
    %v836 = vpack.c.b16 %v680, %v676
    %v837 = vpack.c.b16 %v681, %v677
    %v838 = vpack.c.b16 %v682, %v678
    %v839 = vpack.c.b16 %v683, %v679
    %v840 = vpack.c.b16 %v688, %v684
    %v841 = vpack.c.b16 %v689, %v685
    %v842 = vpack.c.b16 %v690, %v686
    %v843 = vpack.c.b16 %v691, %v687
    %v844 = vpack.c.b16 %v696, %v692
    %v845 = vpack.c.b16 %v697, %v693
    %v846 = vpack.c.b16 %v698, %v694
    %v847 = vpack.c.b16 %v699, %v695
    %v848 = vpack.c.b16 %v704, %v700
    %v849 = vpack.c.b16 %v705, %v701
    %v850 = vpack.c.b16 %v706, %v702
    %v851 = vpack.c.b16 %v707, %v703
    %v852 = vpack.c.b16 %v712, %v708
    %v853 = vpack.c.b16 %v713, %v709
    %v854 = vpack.c.b16 %v714, %v710
    %v855 = vpack.c.b16 %v715, %v711
    %v856 = vpack.c.b16 %v720, %v716
    %v857 = vpack.c.b16 %v721, %v717
    %v858 = vpack.c.b16 %v722, %v718
    %v859 = vpack.c.b16 %v723, %v719
    %v860 = vpack.c.b16 %v728, %v724
    %v861 = vpack.c.b16 %v729, %v725
    %v862 = vpack.c.b16 %v730, %v726
    %v863 = vpack.c.b16 %v731, %v727
    %v864 = vpack.c.b16 %v736, %v732
    %v865 = vpack.c.b16 %v737, %v733
    %v866 = vpack.c.b16 %v738, %v734
    %v867 = vpack.c.b16 %v739, %v735
    %996 = vmatpush.bf16.msra.mxu0 %v768
    %997 = vmatpush.bf16.msra.mxu0 %v764
    %998 = vmatpush.bf16.msra.mxu0 %v760
    %999 = vmatpush.bf16.msra.mxu0 %v756
    %1000 = vmatpush.bf16.msra.mxu0 %v752
    %1001 = vmatpush.bf16.msra.mxu0 %v748
    %1002 = vmatpush.bf16.msra.mxu0 %v744
    %1003 = vmatpush.bf16.msra.mxu0 %v740
    %1004 = vmatmul.bf16.gmra.mxu0 %v214
    %v1005 = vpop.f32.mrf.mxu0
    %v1006 = vadd.f32 %v348, %v1005
    %v1007 = vpop.f32.mrf.mxu0
    %1008 = vdwg.mxu0
    %1009 = vmatpush.bf16.msra.mxu0 %v800
    %1010 = vmatpush.bf16.msra.mxu0 %v796
    %1011 = vmatpush.bf16.msra.mxu0 %v792
    %1012 = vmatpush.bf16.msra.mxu0 %v788
    %1013 = vmatpush.bf16.msra.mxu0 %v784
    %1014 = vmatpush.bf16.msra.mxu0 %v780
    %1015 = vmatpush.bf16.msra.mxu0 %v776
    %1016 = vmatpush.bf16.msra.mxu0 %v772
    %1017 = vmatmul.bf16.gmra.mxu0 %v215
    %v1018 = vpop.f32.mrf.mxu0
    %v1019 = vadd.f32 %v1006, %v1018
    %v1020 = vpop.f32.mrf.mxu0
    %1021 = vdwg.mxu0
    %1022 = vmatpush.bf16.msra.mxu0 %v832
    %1023 = vmatpush.bf16.msra.mxu0 %v828
    %1024 = vmatpush.bf16.msra.mxu0 %v824
    %1025 = vmatpush.bf16.msra.mxu0 %v820
    %1026 = vmatpush.bf16.msra.mxu0 %v816
    %1027 = vmatpush.bf16.msra.mxu0 %v812
    %1028 = vmatpush.bf16.msra.mxu0 %v808
    %1029 = vmatpush.bf16.msra.mxu0 %v804
    %1030 = vmatmul.bf16.gmra.mxu0 %v216
    %v1031 = vpop.f32.mrf.mxu0
    %v1032 = vadd.f32 %v1019, %v1031
    %v1033 = vpop.f32.mrf.mxu0
    %1034 = vdwg.mxu0
    %1035 = vmatpush.bf16.msra.mxu0 %v864
    %1036 = vmatpush.bf16.msra.mxu0 %v860
    %1037 = vmatpush.bf16.msra.mxu0 %v856
    %1038 = vmatpush.bf16.msra.mxu0 %v852
    %1039 = vmatpush.bf16.msra.mxu0 %v848
    %1040 = vmatpush.bf16.msra.mxu0 %v844
    %1041 = vmatpush.bf16.msra.mxu0 %v840
    %1042 = vmatpush.bf16.msra.mxu0 %v836
    %1043 = vmatmul.bf16.gmra.mxu0 %v217
    %v1044 = vpop.f32.mrf.mxu0
    %v1045 = vadd.f32 %v1032, %v1044
    %v1046 = vpop.f32.mrf.mxu0
    %1047 = vdwg.mxu0
    %1048 = vmatpush.bf16.msra.mxu0 %v769
    %1049 = vmatpush.bf16.msra.mxu0 %v765
    %1050 = vmatpush.bf16.msra.mxu0 %v761
    %1051 = vmatpush.bf16.msra.mxu0 %v757
    %1052 = vmatpush.bf16.msra.mxu0 %v753
    %1053 = vmatpush.bf16.msra.mxu0 %v749
    %1054 = vmatpush.bf16.msra.mxu0 %v745
    %1055 = vmatpush.bf16.msra.mxu0 %v741
    %1056 = vmatmul.bf16.gmra.mxu0 %v214
    %v1057 = vpop.f32.mrf.mxu0
    %v1058 = vadd.f32 %v349, %v1057
    %v1059 = vpop.f32.mrf.mxu0
    %1060 = vdwg.mxu0
    %1061 = vmatpush.bf16.msra.mxu0 %v801
    %1062 = vmatpush.bf16.msra.mxu0 %v797
    %1063 = vmatpush.bf16.msra.mxu0 %v793
    %1064 = vmatpush.bf16.msra.mxu0 %v789
    %1065 = vmatpush.bf16.msra.mxu0 %v785
    %1066 = vmatpush.bf16.msra.mxu0 %v781
    %1067 = vmatpush.bf16.msra.mxu0 %v777
    %1068 = vmatpush.bf16.msra.mxu0 %v773
    %1069 = vmatmul.bf16.gmra.mxu0 %v215
    %v1070 = vpop.f32.mrf.mxu0
    %v1071 = vadd.f32 %v1058, %v1070
    %v1072 = vpop.f32.mrf.mxu0
    %1073 = vdwg.mxu0
    %1074 = vmatpush.bf16.msra.mxu0 %v833
    %1075 = vmatpush.bf16.msra.mxu0 %v829
    %1076 = vmatpush.bf16.msra.mxu0 %v825
    %1077 = vmatpush.bf16.msra.mxu0 %v821
    %1078 = vmatpush.bf16.msra.mxu0 %v817
    %1079 = vmatpush.bf16.msra.mxu0 %v813
    %1080 = vmatpush.bf16.msra.mxu0 %v809
    %1081 = vmatpush.bf16.msra.mxu0 %v805
    %1082 = vmatmul.bf16.gmra.mxu0 %v216
    %v1083 = vpop.f32.mrf.mxu0
    %v1084 = vadd.f32 %v1071, %v1083
    %v1085 = vpop.f32.mrf.mxu0
    %1086 = vdwg.mxu0
    %1087 = vmatpush.bf16.msra.mxu0 %v865
    %1088 = vmatpush.bf16.msra.mxu0 %v861
    %1089 = vmatpush.bf16.msra.mxu0 %v857
    %1090 = vmatpush.bf16.msra.mxu0 %v853
    %1091 = vmatpush.bf16.msra.mxu0 %v849
    %1092 = vmatpush.bf16.msra.mxu0 %v845
    %1093 = vmatpush.bf16.msra.mxu0 %v841
    %1094 = vmatpush.bf16.msra.mxu0 %v837
    %1095 = vmatmul.bf16.gmra.mxu0 %v217
    %v1096 = vpop.f32.mrf.mxu0
    %v1097 = vadd.f32 %v1084, %v1096
    %v1098 = vpop.f32.mrf.mxu0
    %1099 = vdwg.mxu0
    %1100 = vmatpush.bf16.msra.mxu0 %v770
    %1101 = vmatpush.bf16.msra.mxu0 %v766
    %1102 = vmatpush.bf16.msra.mxu0 %v762
    %1103 = vmatpush.bf16.msra.mxu0 %v758
    %1104 = vmatpush.bf16.msra.mxu0 %v754
    %1105 = vmatpush.bf16.msra.mxu0 %v750
    %1106 = vmatpush.bf16.msra.mxu0 %v746
    %1107 = vmatpush.bf16.msra.mxu0 %v742
    %1108 = vmatmul.bf16.gmra.mxu0 %v214
    %v1109 = vpop.f32.mrf.mxu0
    %v1110 = vadd.f32 %v350, %v1109
    %v1111 = vpop.f32.mrf.mxu0
    %1112 = vdwg.mxu0
    %1113 = vmatpush.bf16.msra.mxu0 %v802
    %1114 = vmatpush.bf16.msra.mxu0 %v798
    %1115 = vmatpush.bf16.msra.mxu0 %v794
    %1116 = vmatpush.bf16.msra.mxu0 %v790
    %1117 = vmatpush.bf16.msra.mxu0 %v786
    %1118 = vmatpush.bf16.msra.mxu0 %v782
    %1119 = vmatpush.bf16.msra.mxu0 %v778
    %1120 = vmatpush.bf16.msra.mxu0 %v774
    %1121 = vmatmul.bf16.gmra.mxu0 %v215
    %v1122 = vpop.f32.mrf.mxu0
    %v1123 = vadd.f32 %v1110, %v1122
    %v1124 = vpop.f32.mrf.mxu0
    %1125 = vdwg.mxu0
    %1126 = vmatpush.bf16.msra.mxu0 %v834
    %1127 = vmatpush.bf16.msra.mxu0 %v830
    %1128 = vmatpush.bf16.msra.mxu0 %v826
    %1129 = vmatpush.bf16.msra.mxu0 %v822
    %1130 = vmatpush.bf16.msra.mxu0 %v818
    %1131 = vmatpush.bf16.msra.mxu0 %v814
    %1132 = vmatpush.bf16.msra.mxu0 %v810
    %1133 = vmatpush.bf16.msra.mxu0 %v806
    %1134 = vmatmul.bf16.gmra.mxu0 %v216
    %v1135 = vpop.f32.mrf.mxu0
    %v1136 = vadd.f32 %v1123, %v1135
    %v1137 = vpop.f32.mrf.mxu0
    %1138 = vdwg.mxu0
    %1139 = vmatpush.bf16.msra.mxu0 %v866
    %1140 = vmatpush.bf16.msra.mxu0 %v862
    %1141 = vmatpush.bf16.msra.mxu0 %v858
    %1142 = vmatpush.bf16.msra.mxu0 %v854
    %1143 = vmatpush.bf16.msra.mxu0 %v850
    %1144 = vmatpush.bf16.msra.mxu0 %v846
    %1145 = vmatpush.bf16.msra.mxu0 %v842
    %1146 = vmatpush.bf16.msra.mxu0 %v838
    %1147 = vmatmul.bf16.gmra.mxu0 %v217
    %v1148 = vpop.f32.mrf.mxu0
    %v1149 = vadd.f32 %v1136, %v1148
    %v1150 = vpop.f32.mrf.mxu0
    %1151 = vdwg.mxu0
    %1152 = vmatpush.bf16.msra.mxu0 %v771
    %1153 = vmatpush.bf16.msra.mxu0 %v767
    %1154 = vmatpush.bf16.msra.mxu0 %v763
    %1155 = vmatpush.bf16.msra.mxu0 %v759
    %1156 = vmatpush.bf16.msra.mxu0 %v755
    %1157 = vmatpush.bf16.msra.mxu0 %v751
    %1158 = vmatpush.bf16.msra.mxu0 %v747
    %1159 = vmatpush.bf16.msra.mxu0 %v743
    %1160 = vmatmul.bf16.gmra.mxu0 %v214
    %v1161 = vpop.f32.mrf.mxu0
    %v1162 = vadd.f32 %v351, %v1161
    %v1163 = vpop.f32.mrf.mxu0
    %1164 = vdwg.mxu0
    %1165 = vmatpush.bf16.msra.mxu0 %v803
    %1166 = vmatpush.bf16.msra.mxu0 %v799
    %1167 = vmatpush.bf16.msra.mxu0 %v795
    %1168 = vmatpush.bf16.msra.mxu0 %v791
    %1169 = vmatpush.bf16.msra.mxu0 %v787
    %1170 = vmatpush.bf16.msra.mxu0 %v783
    %1171 = vmatpush.bf16.msra.mxu0 %v779
    %1172 = vmatpush.bf16.msra.mxu0 %v775
    %1173 = vmatmul.bf16.gmra.mxu0 %v215
    %v1174 = vpop.f32.mrf.mxu0
    %v1175 = vadd.f32 %v1162, %v1174
    %v1176 = vpop.f32.mrf.mxu0
    %1177 = vdwg.mxu0
    %1178 = vmatpush.bf16.msra.mxu0 %v835
    %1179 = vmatpush.bf16.msra.mxu0 %v831
    %1180 = vmatpush.bf16.msra.mxu0 %v827
    %1181 = vmatpush.bf16.msra.mxu0 %v823
    %1182 = vmatpush.bf16.msra.mxu0 %v819
    %1183 = vmatpush.bf16.msra.mxu0 %v815
    %1184 = vmatpush.bf16.msra.mxu0 %v811
    %1185 = vmatpush.bf16.msra.mxu0 %v807
    %1186 = vmatmul.bf16.gmra.mxu0 %v216
    %v1187 = vpop.f32.mrf.mxu0
    %v1188 = vadd.f32 %v1175, %v1187
    %v1189 = vpop.f32.mrf.mxu0
    %1190 = vdwg.mxu0
    %1191 = vmatpush.bf16.msra.mxu0 %v867
    %1192 = vmatpush.bf16.msra.mxu0 %v863
    %1193 = vmatpush.bf16.msra.mxu0 %v859
    %1194 = vmatpush.bf16.msra.mxu0 %v855
    %1195 = vmatpush.bf16.msra.mxu0 %v851
    %1196 = vmatpush.bf16.msra.mxu0 %v847
    %1197 = vmatpush.bf16.msra.mxu0 %v843
    %1198 = vmatpush.bf16.msra.mxu0 %v839
    %1199 = vmatmul.bf16.gmra.mxu0 %v217
    %v1200 = vpop.f32.mrf.mxu0
    %v1201 = vadd.f32 %v1188, %v1200
    %v1202 = vpop.f32.mrf.mxu0
    %1203 = vdwg.mxu0
    %v1204 = vmax.f32 %v1045, 0.0
    %v1205 = vmax.f32 %v1097, 0.0
    %v1206 = vmax.f32 %v1149, 0.0
    %v1207 = vmax.f32 %v1201, 0.0
    %v1208 = vpack.c.bf16 %v1204, %v1204
    %v1209 = vpack.c.bf16 %v1205, %v1205
    %v1210 = vpack.c.bf16 %v1206, %v1206
    %v1211 = vpack.c.bf16 %v1207, %v1207
    %v1212 = vld [vmem:[#allocation8] sm:$0xf]
    %v1213 = vld [vmem:[#allocation8 + $0x4] sm:$0xf]
    %v1214 = vld [vmem:[#allocation8 + $0x8] sm:$0xf]
    %v1215 = vld [vmem:[#allocation8 + $0xc] sm:$0xf]
    %v1216 = vld [vmem:[#allocation8 + $0x10] sm:$0xf]
    %v1217 = vld [vmem:[#allocation8 + $0x14] sm:$0xf]
    %v1218 = vld [vmem:[#allocation8 + $0x18] sm:$0xf]
    %v1219 = vld [vmem:[#allocation8 + $0x1c] sm:$0xf]
    %v1220 = vld [vmem:[#allocation8 + $0x20] sm:$0xf]
    %v1221 = vld [vmem:[#allocation8 + $0x24] sm:$0xf]
    %v1222 = vld [vmem:[#allocation8 + $0x28] sm:$0xf]
    %v1223 = vld [vmem:[#allocation8 + $0x2c] sm:$0xf]
    %v1224 = vld [vmem:[#allocation8 + $0x30] sm:$0xf]
    %v1225 = vld [vmem:[#allocation8 + $0x34] sm:$0xf]
    %v1226 = vld [vmem:[#allocation8 + $0x38] sm:$0xf]
    %v1227 = vld [vmem:[#allocation8 + $0x3c] sm:$0xf]
    %v1228 = vld [vmem:[#allocation8 + $0x40] sm:$0xf]
    %v1229 = vld [vmem:[#allocation8 + $0x44] sm:$0xf]
    %v1230 = vld [vmem:[#allocation8 + $0x48] sm:$0xf]
    %v1231 = vld [vmem:[#allocation8 + $0x4c] sm:$0xf]
    %v1232 = vld [vmem:[#allocation8 + $0x50] sm:$0xf]
    %v1233 = vld [vmem:[#allocation8 + $0x54] sm:$0xf]
    %v1234 = vld [vmem:[#allocation8 + $0x58] sm:$0xf]
    %v1235 = vld [vmem:[#allocation8 + $0x5c] sm:$0xf]
    %v1236 = vld [vmem:[#allocation8 + $0x60] sm:$0xf]
    %v1237 = vld [vmem:[#allocation8 + $0x64] sm:$0xf]
    %v1238 = vld [vmem:[#allocation8 + $0x68] sm:$0xf]
    %v1239 = vld [vmem:[#allocation8 + $0x6c] sm:$0xf]
    %v1240 = vld [vmem:[#allocation8 + $0x70] sm:$0xf]
    %v1241 = vld [vmem:[#allocation8 + $0x74] sm:$0xf]
    %v1242 = vld [vmem:[#allocation8 + $0x78] sm:$0xf]
    %v1243 = vld [vmem:[#allocation8 + $0x7c] sm:$0xf]
    %v1244 = vld [vmem:[#allocation8 + $0x80] sm:$0xf]
    %v1245 = vld [vmem:[#allocation8 + $0x84] sm:$0xf]
    %v1246 = vld [vmem:[#allocation8 + $0x88] sm:$0xf]
    %v1247 = vld [vmem:[#allocation8 + $0x8c] sm:$0xf]
    %v1248 = vld [vmem:[#allocation8 + $0x90] sm:$0xf]
    %v1249 = vld [vmem:[#allocation8 + $0x94] sm:$0xf]
    %v1250 = vld [vmem:[#allocation8 + $0x98] sm:$0xf]
    %v1251 = vld [vmem:[#allocation8 + $0x9c] sm:$0xf]
    %v1252 = vld [vmem:[#allocation8 + $0xa0] sm:$0xf]
    %v1253 = vld [vmem:[#allocation8 + $0xa4] sm:$0xf]
    %v1254 = vld [vmem:[#allocation8 + $0xa8] sm:$0xf]
    %v1255 = vld [vmem:[#allocation8 + $0xac] sm:$0xf]
    %v1256 = vld [vmem:[#allocation8 + $0xb0] sm:$0xf]
    %v1257 = vld [vmem:[#allocation8 + $0xb4] sm:$0xf]
    %v1258 = vld [vmem:[#allocation8 + $0xb8] sm:$0xf]
    %v1259 = vld [vmem:[#allocation8 + $0xbc] sm:$0xf]
    %v1260 = vld [vmem:[#allocation8 + $0xc0] sm:$0xf]
    %v1261 = vld [vmem:[#allocation8 + $0xc4] sm:$0xf]
    %v1262 = vld [vmem:[#allocation8 + $0xc8] sm:$0xf]
    %v1263 = vld [vmem:[#allocation8 + $0xcc] sm:$0xf]
    %v1264 = vld [vmem:[#allocation8 + $0xd0] sm:$0xf]
    %v1265 = vld [vmem:[#allocation8 + $0xd4] sm:$0xf]
    %v1266 = vld [vmem:[#allocation8 + $0xd8] sm:$0xf]
    %v1267 = vld [vmem:[#allocation8 + $0xdc] sm:$0xf]
    %v1268 = vld [vmem:[#allocation8 + $0xe0] sm:$0xf]
    %v1269 = vld [vmem:[#allocation8 + $0xe4] sm:$0xf]
    %v1270 = vld [vmem:[#allocation8 + $0xe8] sm:$0xf]
    %v1271 = vld [vmem:[#allocation8 + $0xec] sm:$0xf]
    %v1272 = vld [vmem:[#allocation8 + $0xf0] sm:$0xf]
    %v1273 = vld [vmem:[#allocation8 + $0xf4] sm:$0xf]
    %v1274 = vld [vmem:[#allocation8 + $0xf8] sm:$0xf]
    %v1275 = vld [vmem:[#allocation8 + $0xfc] sm:$0xf]
    %v1276 = vld [vmem:[%s6] sm:$0x1]
    %v1278 = vperm.slane %v1276, 0
    %v1344 = vunpack.c.l.b16 %v1212
    %v1345 = vunpack.c.l.b16 %v1213
    %v1346 = vunpack.c.l.b16 %v1214
    %v1347 = vunpack.c.l.b16 %v1215
    %v1348 = vunpack.c.l.b16 %v1216
    %v1349 = vunpack.c.l.b16 %v1217
    %v1350 = vunpack.c.l.b16 %v1218
    %v1351 = vunpack.c.l.b16 %v1219
    %v1352 = vunpack.c.l.b16 %v1220
    %v1353 = vunpack.c.l.b16 %v1221
    %v1354 = vunpack.c.l.b16 %v1222
    %v1355 = vunpack.c.l.b16 %v1223
    %v1356 = vunpack.c.l.b16 %v1224
    %v1357 = vunpack.c.l.b16 %v1225
    %v1358 = vunpack.c.l.b16 %v1226
    %v1359 = vunpack.c.l.b16 %v1227
    %v1360 = vunpack.c.l.b16 %v1228
    %v1361 = vunpack.c.l.b16 %v1229
    %v1362 = vunpack.c.l.b16 %v1230
    %v1363 = vunpack.c.l.b16 %v1231
    %v1364 = vunpack.c.l.b16 %v1232
    %v1365 = vunpack.c.l.b16 %v1233
    %v1366 = vunpack.c.l.b16 %v1234
    %v1367 = vunpack.c.l.b16 %v1235
    %v1368 = vunpack.c.l.b16 %v1236
    %v1369 = vunpack.c.l.b16 %v1237
    %v1370 = vunpack.c.l.b16 %v1238
    %v1371 = vunpack.c.l.b16 %v1239
    %v1372 = vunpack.c.l.b16 %v1240
    %v1373 = vunpack.c.l.b16 %v1241
    %v1374 = vunpack.c.l.b16 %v1242
    %v1375 = vunpack.c.l.b16 %v1243
    %v1376 = vunpack.c.l.b16 %v1244
    %v1377 = vunpack.c.l.b16 %v1245
    %v1378 = vunpack.c.l.b16 %v1246
    %v1379 = vunpack.c.l.b16 %v1247
    %v1380 = vunpack.c.l.b16 %v1248
    %v1381 = vunpack.c.l.b16 %v1249
    %v1382 = vunpack.c.l.b16 %v1250
    %v1383 = vunpack.c.l.b16 %v1251
    %v1384 = vunpack.c.l.b16 %v1252
    %v1385 = vunpack.c.l.b16 %v1253
    %v1386 = vunpack.c.l.b16 %v1254
    %v1387 = vunpack.c.l.b16 %v1255
    %v1388 = vunpack.c.l.b16 %v1256
    %v1389 = vunpack.c.l.b16 %v1257
    %v1390 = vunpack.c.l.b16 %v1258
    %v1391 = vunpack.c.l.b16 %v1259
    %v1392 = vunpack.c.l.b16 %v1260
    %v1393 = vunpack.c.l.b16 %v1261
    %v1394 = vunpack.c.l.b16 %v1262
    %v1395 = vunpack.c.l.b16 %v1263
    %v1396 = vunpack.c.l.b16 %v1264
    %v1397 = vunpack.c.l.b16 %v1265
    %v1398 = vunpack.c.l.b16 %v1266
    %v1399 = vunpack.c.l.b16 %v1267
    %v1400 = vunpack.c.l.b16 %v1268
    %v1401 = vunpack.c.l.b16 %v1269
    %v1402 = vunpack.c.l.b16 %v1270
    %v1403 = vunpack.c.l.b16 %v1271
    %v1404 = vunpack.c.l.b16 %v1272
    %v1405 = vunpack.c.l.b16 %v1273
    %v1406 = vunpack.c.l.b16 %v1274
    %v1407 = vunpack.c.l.b16 %v1275
    %v1408 = vpack.c.b16 %v1345, %v1344
    %v1409 = vpack.c.b16 %v1347, %v1346
    %v1410 = vpack.c.b16 %v1349, %v1348
    %v1411 = vpack.c.b16 %v1351, %v1350
    %v1412 = vpack.c.b16 %v1353, %v1352
    %v1413 = vpack.c.b16 %v1355, %v1354
    %v1414 = vpack.c.b16 %v1357, %v1356
    %v1415 = vpack.c.b16 %v1359, %v1358
    %v1416 = vpack.c.b16 %v1361, %v1360
    %v1417 = vpack.c.b16 %v1363, %v1362
    %v1418 = vpack.c.b16 %v1365, %v1364
    %v1419 = vpack.c.b16 %v1367, %v1366
    %v1420 = vpack.c.b16 %v1369, %v1368
    %v1421 = vpack.c.b16 %v1371, %v1370
    %v1422 = vpack.c.b16 %v1373, %v1372
    %v1423 = vpack.c.b16 %v1375, %v1374
    %v1424 = vpack.c.b16 %v1377, %v1376
    %v1425 = vpack.c.b16 %v1379, %v1378
    %v1426 = vpack.c.b16 %v1381, %v1380
    %v1427 = vpack.c.b16 %v1383, %v1382
    %v1428 = vpack.c.b16 %v1385, %v1384
    %v1429 = vpack.c.b16 %v1387, %v1386
    %v1430 = vpack.c.b16 %v1389, %v1388
    %v1431 = vpack.c.b16 %v1391, %v1390
    %v1432 = vpack.c.b16 %v1393, %v1392
    %v1433 = vpack.c.b16 %v1395, %v1394
    %v1434 = vpack.c.b16 %v1397, %v1396
    %v1435 = vpack.c.b16 %v1399, %v1398
    %v1436 = vpack.c.b16 %v1401, %v1400
    %v1437 = vpack.c.b16 %v1403, %v1402
    %v1438 = vpack.c.b16 %v1405, %v1404
    %v1439 = vpack.c.b16 %v1407, %v1406
    %1472 = vmatpush.bf16.msra.mxu0 %v1415
    %1473 = vmatpush.bf16.msra.mxu0 %v1414
    %1474 = vmatpush.bf16.msra.mxu0 %v1413
    %1475 = vmatpush.bf16.msra.mxu0 %v1412
    %1476 = vmatpush.bf16.msra.mxu0 %v1411
    %1477 = vmatpush.bf16.msra.mxu0 %v1410
    %1478 = vmatpush.bf16.msra.mxu0 %v1409
    %1479 = vmatpush.bf16.msra.mxu0 %v1408
    %1480 = vmatmul.bf16.gmra.mxu0 %v1208
    %v1481 = vpop.f32.mrf.mxu0
    %v1482 = vadd.f32 %v1278, %v1481
    %v1483 = vpop.f32.mrf.mxu0
    %1484 = vdwg.mxu0
    %1485 = vmatpush.bf16.msra.mxu0 %v1423
    %1486 = vmatpush.bf16.msra.mxu0 %v1422
    %1487 = vmatpush.bf16.msra.mxu0 %v1421
    %1488 = vmatpush.bf16.msra.mxu0 %v1420
    %1489 = vmatpush.bf16.msra.mxu0 %v1419
    %1490 = vmatpush.bf16.msra.mxu0 %v1418
    %1491 = vmatpush.bf16.msra.mxu0 %v1417
    %1492 = vmatpush.bf16.msra.mxu0 %v1416
    %1493 = vmatmul.bf16.gmra.mxu0 %v1209
    %v1494 = vpop.f32.mrf.mxu0
    %v1495 = vadd.f32 %v1482, %v1494
    %v1496 = vpop.f32.mrf.mxu0
    %1497 = vdwg.mxu0
    %1498 = vmatpush.bf16.msra.mxu0 %v1431
    %1499 = vmatpush.bf16.msra.mxu0 %v1430
    %1500 = vmatpush.bf16.msra.mxu0 %v1429
    %1501 = vmatpush.bf16.msra.mxu0 %v1428
    %1502 = vmatpush.bf16.msra.mxu0 %v1427
    %1503 = vmatpush.bf16.msra.mxu0 %v1426
    %1504 = vmatpush.bf16.msra.mxu0 %v1425
    %1505 = vmatpush.bf16.msra.mxu0 %v1424
    %1506 = vmatmul.bf16.gmra.mxu0 %v1210
    %v1507 = vpop.f32.mrf.mxu0
    %v1508 = vadd.f32 %v1495, %v1507
    %v1509 = vpop.f32.mrf.mxu0
    %1510 = vdwg.mxu0
    %1511 = vmatpush.bf16.msra.mxu0 %v1439
    %1512 = vmatpush.bf16.msra.mxu0 %v1438
    %1513 = vmatpush.bf16.msra.mxu0 %v1437
    %1514 = vmatpush.bf16.msra.mxu0 %v1436
    %1515 = vmatpush.bf16.msra.mxu0 %v1435
    %1516 = vmatpush.bf16.msra.mxu0 %v1434
    %1517 = vmatpush.bf16.msra.mxu0 %v1433
    %1518 = vmatpush.bf16.msra.mxu0 %v1432
    %1519 = vmatmul.bf16.gmra.mxu0 %v1211
    %v1520 = vpop.f32.mrf.mxu0
    %v1521 = vadd.f32 %v1508, %v1520
    %v1522 = vpop.f32.mrf.mxu0
    %1523 = vdwg.mxu0
    %v1524 = vmax.f32 %v1521, 0.0
    %v1525 = vpack.c.bf16 %v1524, %v1524
    %v1526 = vld [vmem:[%s7] sm:$0xf]
    %v1527 = vld [vmem:[%s7 + $0x4] sm:$0xf]
    %v1528 = vld [vmem:[%s7 + $0x8] sm:$0xf]
    %v1529 = vld [vmem:[%s7 + $0xc] sm:$0xf]
    %v1530 = vld [vmem:[%s7 + $0x10] sm:$0xf]
    %v1531 = vld [vmem:[%s7 + $0x14] sm:$0xf]
    %v1532 = vld [vmem:[%s7 + $0x18] sm:$0xf]
    %v1533 = vld [vmem:[%s7 + $0x1c] sm:$0xf]
    %v1534 = vld [vmem:[%s7 + $0x20] sm:$0xf]
    %v1535 = vld [vmem:[%s7 + $0x24] sm:$0xf]
    %v1536 = vld [vmem:[%s7 + $0x28] sm:$0xf]
    %v1537 = vld [vmem:[%s7 + $0x2c] sm:$0xf]
    %v1538 = vld [vmem:[%s7 + $0x30] sm:$0xf]
    %v1539 = vld [vmem:[%s7 + $0x34] sm:$0xf]
    %v1540 = vld [vmem:[%s7 + $0x38] sm:$0xf]
    %v1541 = vld [vmem:[%s7 + $0x3c] sm:$0xf]
    %v1542 = vld [vmem:[#allocation2] sm:$0x1]
    %v1544 = vperm.slane %v1542, 0
    %v1562 = vunpack.c.l.b16 %v1526
    %v1563 = vunpack.c.l.b16 %v1527
    %v1564 = vunpack.c.l.b16 %v1528
    %v1565 = vunpack.c.l.b16 %v1529
    %v1566 = vunpack.c.l.b16 %v1530
    %v1567 = vunpack.c.l.b16 %v1531
    %v1568 = vunpack.c.l.b16 %v1532
    %v1569 = vunpack.c.l.b16 %v1533
    %v1570 = vunpack.c.l.b16 %v1534
    %v1571 = vunpack.c.l.b16 %v1535
    %v1572 = vunpack.c.l.b16 %v1536
    %v1573 = vunpack.c.l.b16 %v1537
    %v1574 = vunpack.c.l.b16 %v1538
    %v1575 = vunpack.c.l.b16 %v1539
    %v1576 = vunpack.c.l.b16 %v1540
    %v1577 = vunpack.c.l.b16 %v1541
    %v1578 = vpack.c.b16 %v1563, %v1562
    %v1579 = vpack.c.b16 %v1565, %v1564
    %v1580 = vpack.c.b16 %v1567, %v1566
    %v1581 = vpack.c.b16 %v1569, %v1568
    %v1582 = vpack.c.b16 %v1571, %v1570
    %v1583 = vpack.c.b16 %v1573, %v1572
    %v1584 = vpack.c.b16 %v1575, %v1574
    %v1585 = vpack.c.b16 %v1577, %v1576
    %1594 = vmatpush.bf16.msra.mxu0 %v1585
    %1595 = vmatpush.bf16.msra.mxu0 %v1584
    %1596 = vmatpush.bf16.msra.mxu0 %v1583
    %1597 = vmatpush.bf16.msra.mxu0 %v1582
    %1598 = vmatpush.bf16.msra.mxu0 %v1581
    %1599 = vmatpush.bf16.msra.mxu0 %v1580
    %1600 = vmatpush.bf16.msra.mxu0 %v1579
    %1601 = vmatpush.bf16.msra.mxu0 %v1578
    %1602 = vmatmul.bf16.gmra.mxu0 %v1525
    %v1603 = vpop.f32.mrf.mxu0
    %v1604 = vadd.f32 %v1544, %v1603
    %v1605 = vpop.f32.mrf.mxu0
    %1606 = vdwg.mxu0
    %vm1607 = vcmask 7168
    %1608 = vst.msk [vmem:[%s9] sm:$0xff] %vm1607, %v1604
    // Predicated region
    $region54: #{_critic_forward.1} parent=1 // pred_check
      _
    $region55: #{_critic_forward.1} parent=1 // pred_check_branch
      %1610 = sbr.rel (0) target = $region57
    $region56: #{_critic_forward.1} parent=1 // pred_region
      _
    $region57: #{_critic_forward.1} parent=1 // pred_fallthru
      _
    // Predicated region
    $region58: #{_critic_forward.1} parent=1 // pred_check
      _
    $region59: #{_critic_forward.1} parent=1 // pred_check_branch
      %1612 = sbr.rel (0) target = $region61
    $region60: #{_critic_forward.1} parent=1 // pred_region
      _
    $region61: #{_critic_forward.1} parent=1 // pred_fallthru
      _
    %1613 = vsyncpa [#allocation4], 1
    %1614 = vsyncpa [#allocation6], 1
    %1615 = vsyncpa [#allocation9], 1

// kernel: _critic_forward.1
$region0: #{_critic_forward.1}
  #allocation0 [shape = 'u32[]', space=smem, size = 0x4, offset = 0x4, fixed_abs, tag = 'smem constant byte address 0x4 - core index']
  #allocation1 [shape = 'u32[72,128]{1,0:T(1,128)}', space=vmem, size = 0x9000, scoped, tag = 'internal scratch']
  #allocation2 [shape = 'f32[1,1]{1,0:T(1,128)S(1)}', space=vmem, size = 0x200, scoped, tag = 'scoped memory for _critic_forward.1']
  %s0 = inlined_call_operand.hbm [shape: f32[8,32], index: 0, kind: input, shape index: {}]
  %s1 = inlined_call_operand.vmem [shape: bf16[32,512], index: 1, kind: input, shape index: {}]
  %s2 = inlined_call_operand.vmem [shape: f32[1,512], index: 2, kind: input, shape index: {}]
  %s3 = inlined_call_operand.hbm [shape: bf16[512,512], index: 3, kind: input, shape index: {}]
  %s4 = inlined_call_operand.hbm [shape: f32[1,512], index: 4, kind: input, shape index: {}]
  %s5 = inlined_call_operand.hbm [shape: bf16[512,128], index: 5, kind: input, shape index: {}]
  %s6 = inlined_call_operand.vmem [shape: f32[1,128], index: 6, kind: input, shape index: {}]
  %s7 = inlined_call_operand.vmem [shape: bf16[128,1], index: 7, kind: input, shape index: {}]
  %s8 = inlined_call_operand.<no memory space> [shape: f32[1,1], index: 8, kind: input, shape index: {}]
  %s9 = inlined_call_operand.vmem [shape: f32[8,1], index: 9, kind: output, shape index: {}]
  %s10 = sld [smem:[#allocation0]]
  $region62: #{_critic_forward.1} parent=0
    _
  %s12 = ssub.s32 1, %s10
  %s13 = scalar_select 0, %s12, %s10
  %v14 = vstv %s8
  %15 = vst [vmem:[#allocation2] sm:$0x1] %v14
  $region1: #{_critic_forward.1} parent=0
    #allocation3 [shape = 'u8[4096]{0}', space=vmem, size = 0x1000, scoped, tag = 'input window, operand 0, single buffered']
    #allocation4 [shape = 's32[1]{0}', space=sflag, size = 0x4, scoped, tag = 'scoped memory for _critic_forward.1']
    #allocation5 [shape = 'u8[524288]{0}', space=vmem, size = 0x80000, scoped, tag = 'input window, operand 3, single buffered']
    #allocation6 [shape = 's32[1]{0}', space=sflag, size = 0x4, scoped, tag = 'scoped memory for _critic_forward.1']
    #allocation7 [shape = 'u8[2048]{0}', space=vmem, size = 0x800, scoped, tag = 'input window, operand 4, single buffered']
    #allocation8 [shape = 'u8[131072]{0}', space=vmem, size = 0x20000, scoped, tag = 'input window, operand 5, single buffered']
    #allocation9 [shape = 's32[1]{0}', space=sflag, size = 0x4, scoped, tag = 'scoped memory for _critic_forward.1']
    %16 = vsyncpa [#allocation4], 0
    %17 = vsyncpa [#allocation6], 0
    %18 = vsyncpa [#allocation9], 0
    // Predicated region
    $region2: #{_critic_forward.1} parent=1 // pred_check
      _
    $region3: #{_critic_forward.1} parent=1 // pred_check_branch
      %20 = sbr.rel (0) target = $region5
    $region4: #{_critic_forward.1} parent=1 // pred_region
      %22 = vsyncadd [#allocation4], 0
      %s24 = sshll.u32 %s0, 4
      %s25 = int_to_ptr.hbm [resolvable:$true] %s24
      %s26 = sshll.u32 [#allocation3], 4
      %s27 = int_to_ptr.vmem [resolvable:$true] %s26
      %29 = dma.hbm_to_vmem [thread:$0]  %s25, 128, %s27, [#allocation4]
    $region5: #{_critic_forward.1} parent=1 // pred_fallthru
      _
    // Predicated region
    $region6: #{_critic_forward.1} parent=1 // pred_check
      _
    $region7: #{_critic_forward.1} parent=1 // pred_check_branch
      %31 = sbr.rel (0) target = $region9
    $region8: #{_critic_forward.1} parent=1 // pred_region
      _
    $region9: #{_critic_forward.1} parent=1 // pred_fallthru
      _
    // Predicated region
    $region10: #{_critic_forward.1} parent=1 // pred_check
      _
    $region11: #{_critic_forward.1} parent=1 // pred_check_branch
      %33 = sbr.rel (0) target = $region13
    $region12: #{_critic_forward.1} parent=1 // pred_region
      _
    $region13: #{_critic_forward.1} parent=1 // pred_fallthru
      _
    // Predicated region
    $region14: #{_critic_forward.1} parent=1 // pred_check
      _
    $region15: #{_critic_forward.1} parent=1 // pred_check_branch
      %35 = sbr.rel (0) target = $region17
    $region16: #{_critic_forward.1} parent=1 // pred_region
      %37 = vsyncadd [#allocation6], 0
      %s38 = sshll.u32 %s3, 4
      %s39 = int_to_ptr.hbm [resolvable:$true] %s38
      %s40 = sshll.u32 [#allocation5], 4
      %s41 = int_to_ptr.vmem [resolvable:$true] %s40
      %46 = dma.hbm_to_vmem [thread:$0]  %s39, 16384, %s41, [#allocation6], 256, 256, 16
    $region17: #{_critic_forward.1} parent=1 // pred_fallthru
      _
    // Predicated region
    $region18: #{_critic_forward.1} parent=1 // pred_check
      _
    $region19: #{_critic_forward.1} parent=1 // pred_check_branch
      %48 = sbr.rel (0) target = $region21
    $region20: #{_critic_forward.1} parent=1 // pred_region
      %50 = vsyncadd [#allocation6], 0
      %s52 = sshll.u32 %s4, 4
      %s53 = int_to_ptr.hbm [resolvable:$true] %s52
      %s54 = sshll.u32 [#allocation7], 4
      %s55 = int_to_ptr.vmem [resolvable:$true] %s54
      %57 = dma.hbm_to_vmem [thread:$0]  %s53, 64, %s55, [#allocation6]
    $region21: #{_critic_forward.1} parent=1 // pred_fallthru
      _
    // Predicated region
    $region22: #{_critic_forward.1} parent=1 // pred_check
      _
    $region23: #{_critic_forward.1} parent=1 // pred_check_branch
      %59 = sbr.rel (0) target = $region25
    $region24: #{_critic_forward.1} parent=1 // pred_region
      %61 = vsyncadd [#allocation9], 0
      %s62 = sshll.u32 %s5, 4
      %s63 = int_to_ptr.hbm [resolvable:$true] %s62
      %s64 = sshll.u32 [#allocation8], 4
      %s65 = int_to_ptr.vmem [resolvable:$true] %s64
      %70 = dma.hbm_to_vmem [thread:$0]  %s63, 4096, %s65, [#allocation9], 64, 64, 4
    $region25: #{_critic_forward.1} parent=1 // pred_fallthru
      _
    // Predicated region
    $region26: #{_critic_forward.1} parent=1 // pred_check
      _
    $region27: #{_critic_forward.1} parent=1 // pred_check_branch
      %72 = sbr.rel (0) target = $region29
    $region28: #{_critic_forward.1} parent=1 // pred_region
      _
    $region29: #{_critic_forward.1} parent=1 // pred_fallthru
      _
    // Predicated region
    $region30: #{_critic_forward.1} parent=1 // pred_check
      _
    $region31: #{_critic_forward.1} parent=1 // pred_check_branch
      %74 = sbr.rel (0) target = $region33
    $region32: #{_critic_forward.1} parent=1 // pred_region
      _
    $region33: #{_critic_forward.1} parent=1 // pred_fallthru
      _
    // Predicated region
    $region34: #{_critic_forward.1} parent=1 // pred_check
      _
    $region35: #{_critic_forward.1} parent=1 // pred_check_branch
      %76 = sbr.rel (0) target = $region37
    $region36: #{_critic_forward.1} parent=1 // pred_region
      _
    $region37: #{_critic_forward.1} parent=1 // pred_fallthru
      _
    // Predicated region
    $region38: #{_critic_forward.1} parent=1 // pred_check
      _
    $region39: #{_critic_forward.1} parent=1 // pred_check_branch
      %78 = sbr.rel (0) target = $region41
    $region40: #{_critic_forward.1} parent=1 // pred_region
      %80 = dma.done [#allocation4], 128
    $region41: #{_critic_forward.1} parent=1 // pred_fallthru
      _
    // Predicated region
    $region42: #{_critic_forward.1} parent=1 // pred_check
      _
    $region43: #{_critic_forward.1} parent=1 // pred_check_branch
      %82 = sbr.rel (0) target = $region45
    $region44: #{_critic_forward.1} parent=1 // pred_region
      %84 = dma.done [#allocation6], 16384
    $region45: #{_critic_forward.1} parent=1 // pred_fallthru
      _
    // Predicated region
    $region46: #{_critic_forward.1} parent=1 // pred_check
      _
    $region47: #{_critic_forward.1} parent=1 // pred_check_branch
      %86 = sbr.rel (0) target = $region49
    $region48: #{_critic_forward.1} parent=1 // pred_region
      %88 = dma.done [#allocation6], 64
    $region49: #{_critic_forward.1} parent=1 // pred_fallthru
      _
    // Predicated region
    $region50: #{_critic_forward.1} parent=1 // pred_check
      _
    $region51: #{_critic_forward.1} parent=1 // pred_check_branch
      %90 = sbr.rel (0) target = $region53
    $region52: #{_critic_forward.1} parent=1 // pred_region
      %92 = dma.done [#allocation9], 4096
    $region53: #{_critic_forward.1} parent=1 // pred_fallthru
      _
    %v94 = vld [vmem:[#allocation3] sm:$0xff]
    %v95 = vpack.c.bf16 %v94, %v94
    %v96 = vld [vmem:[%s1] sm:$0xff]
    %v97 = vld [vmem:[%s1 + $0x8] sm:$0xff]
    %v98 = vld [vmem:[%s1 + $0x10] sm:$0xff]
    %v99 = vld [vmem:[%s1 + $0x18] sm:$0xff]
    %v100 = vld [vmem:[%s1 + $0x20] sm:$0xff]
    %v101 = vld [vmem:[%s1 + $0x28] sm:$0xff]
    %v102 = vld [vmem:[%s1 + $0x30] sm:$0xff]
    %v103 = vld [vmem:[%s1 + $0x38] sm:$0xff]
    %v104 = vld [vmem:[%s2] sm:$0xf]
    %v106 = vperm.slane %v104, 0
    %v107 = vperm.slane %v104, 1
    %v108 = vperm.slane %v104, 2
    %v109 = vperm.slane %v104, 3
    %v122 = vunpack.c.l.b16 %v96
    %v123 = vunpack.c.h.b16 %v96
    %v124 = vunpack.c.l.b16 %v97
    %v125 = vunpack.c.h.b16 %v97
    %v126 = vunpack.c.l.b16 %v98
    %v127 = vunpack.c.h.b16 %v98
    %v128 = vunpack.c.l.b16 %v99
    %v129 = vunpack.c.h.b16 %v99
    %v130 = vunpack.c.l.b16 %v100
    %v131 = vunpack.c.h.b16 %v100
    %v132 = vunpack.c.l.b16 %v101
    %v133 = vunpack.c.h.b16 %v101
    %v134 = vunpack.c.l.b16 %v102
    %v135 = vunpack.c.h.b16 %v102
    %v136 = vunpack.c.l.b16 %v103
    %v137 = vunpack.c.h.b16 %v103
    %v138 = vpack.c.b16 %v126, %v122
    %v139 = vpack.c.b16 %v127, %v123
    %v140 = vpack.c.b16 %v128, %v124
    %v141 = vpack.c.b16 %v129, %v125
    %v142 = vpack.c.b16 %v134, %v130
    %v143 = vpack.c.b16 %v135, %v131
    %v144 = vpack.c.b16 %v136, %v132
    %v145 = vpack.c.b16 %v137, %v133
    %vm154 = vcmask 261120
    %v156 = vsel %vm154, %v95, 0
    %158 = vmatpush.bf16.msra.mxu0 0
    %159 = vmatpush.bf16.msra.mxu0 0
    %160 = vmatpush.bf16.msra.mxu0 0
    %161 = vmatpush.bf16.msra.mxu0 0
    %162 = vmatpush.bf16.msra.mxu0 0
    %163 = vmatpush.bf16.msra.mxu0 0
    %164 = vmatpush.bf16.msra.mxu0 %v142
    %165 = vmatpush.bf16.msra.mxu0 %v138
    %166 = vmatmul.bf16.gmra.mxu0 %v156
    %v167 = vpop.f32.mrf.mxu0
    %v168 = vadd.f32 %v106, %v167
    %v169 = vpop.f32.mrf.mxu0
    %170 = vdwg.mxu0
    %171 = vmatpush.bf16.msra.mxu0 0
    %172 = vmatpush.bf16.msra.mxu0 0
    %173 = vmatpush.bf16.msra.mxu0 0
    %174 = vmatpush.bf16.msra.mxu0 0
    %175 = vmatpush.bf16.msra.mxu0 0
    %176 = vmatpush.bf16.msra.mxu0 0
    %177 = vmatpush.bf16.msra.mxu0 %v143
    %178 = vmatpush.bf16.msra.mxu0 %v139
    %179 = vmatmul.bf16.gmra.mxu0 %v156
    %v180 = vpop.f32.mrf.mxu0
    %v181 = vadd.f32 %v107, %v180
    %v182 = vpop.f32.mrf.mxu0
    %183 = vdwg.mxu0
    %184 = vmatpush.bf16.msra.mxu0 0
    %185 = vmatpush.bf16.msra.mxu0 0
    %186 = vmatpush.bf16.msra.mxu0 0
    %187 = vmatpush.bf16.msra.mxu0 0
    %188 = vmatpush.bf16.msra.mxu0 0
    %189 = vmatpush.bf16.msra.mxu0 0
    %190 = vmatpush.bf16.msra.mxu0 %v144
    %191 = vmatpush.bf16.msra.mxu0 %v140
    %192 = vmatmul.bf16.gmra.mxu0 %v156
    %v193 = vpop.f32.mrf.mxu0
    %v194 = vadd.f32 %v108, %v193
    %v195 = vpop.f32.mrf.mxu0
    %196 = vdwg.mxu0
    %197 = vmatpush.bf16.msra.mxu0 0
    %198 = vmatpush.bf16.msra.mxu0 0
    %199 = vmatpush.bf16.msra.mxu0 0
    %200 = vmatpush.bf16.msra.mxu0 0
    %201 = vmatpush.bf16.msra.mxu0 0
    %202 = vmatpush.bf16.msra.mxu0 0
    %203 = vmatpush.bf16.msra.mxu0 %v145
    %204 = vmatpush.bf16.msra.mxu0 %v141
    %205 = vmatmul.bf16.gmra.mxu0 %v156
    %v206 = vpop.f32.mrf.mxu0
    %v207 = vadd.f32 %v109, %v206
    %v208 = vpop.f32.mrf.mxu0
    %209 = vdwg.mxu0
    %v210 = vmax.f32 %v168, 0.0
    %v211 = vmax.f32 %v181, 0.0
    %v212 = vmax.f32 %v194, 0.0
    %v213 = vmax.f32 %v207, 0.0
    %v214 = vpack.c.bf16 %v210, %v210
    %v215 = vpack.c.bf16 %v211, %v211
    %v216 = vpack.c.bf16 %v212, %v212
    %v217 = vpack.c.bf16 %v213, %v213
    %v218 = vld [vmem:[#allocation5] sm:$0xff]
    %v219 = vld [vmem:[#allocation5 + $0x8] sm:$0xff]
    %v220 = vld [vmem:[#allocation5 + $0x10] sm:$0xff]
    %v221 = vld [vmem:[#allocation5 + $0x18] sm:$0xff]
    %v222 = vld [vmem:[#allocation5 + $0x20] sm:$0xff]
    %v223 = vld [vmem:[#allocation5 + $0x28] sm:$0xff]
    %v224 = vld [vmem:[#allocation5 + $0x30] sm:$0xff]
    %v225 = vld [vmem:[#allocation5 + $0x38] sm:$0xff]
    %v226 = vld [vmem:[#allocation5 + $0x40] sm:$0xff]
    %v227 = vld [vmem:[#allocation5 + $0x48] sm:$0xff]
    %v228 = vld [vmem:[#allocation5 + $0x50] sm:$0xff]
    %v229 = vld [vmem:[#allocation5 + $0x58] sm:$0xff]
    %v230 = vld [vmem:[#allocation5 + $0x60] sm:$0xff]
    %v231 = vld [vmem:[#allocation5 + $0x68] sm:$0xff]
    %v232 = vld [vmem:[#allocation5 + $0x70] sm:$0xff]
    %v233 = vld [vmem:[#allocation5 + $0x78] sm:$0xff]
    %v234 = vld [vmem:[#allocation5 + $0x80] sm:$0xff]
    %v235 = vld [vmem:[#allocation5 + $0x88] sm:$0xff]
    %v236 = vld [vmem:[#allocation5 + $0x90] sm:$0xff]
    %v237 = vld [vmem:[#allocation5 + $0x98] sm:$0xff]
    %v238 = vld [vmem:[#allocation5 + $0xa0] sm:$0xff]
    %v239 = vld [vmem:[#allocation5 + $0xa8] sm:$0xff]
    %v240 = vld [vmem:[#allocation5 + $0xb0] sm:$0xff]
    %v241 = vld [vmem:[#allocation5 + $0xb8] sm:$0xff]
    %v242 = vld [vmem:[#allocation5 + $0xc0] sm:$0xff]
    %v243 = vld [vmem:[#allocation5 + $0xc8] sm:$0xff]
    %v244 = vld [vmem:[#allocation5 + $0xd0] sm:$0xff]
    %v245 = vld [vmem:[#allocation5 + $0xd8] sm:$0xff]
    %v246 = vld [vmem:[#allocation5 + $0xe0] sm:$0xff]
    %v247 = vld [vmem:[#allocation5 + $0xe8] sm:$0xff]
    %v248 = vld [vmem:[#allocation5 + $0xf0] sm:$0xff]
    %v249 = vld [vmem:[#allocation5 + $0xf8] sm:$0xff]
    %v250 = vld [vmem:[#allocation5 + $0x100] sm:$0xff]
    %v251 = vld [vmem:[#allocation5 + $0x108] sm:$0xff]
    %v252 = vld [vmem:[#allocation5 + $0x110] sm:$0xff]
    %v253 = vld [vmem:[#allocation5 + $0x118] sm:$0xff]
    %v254 = vld [vmem:[#allocation5 + $0x120] sm:$0xff]
    %v255 = vld [vmem:[#allocation5 + $0x128] sm:$0xff]
    %v256 = vld [vmem:[#allocation5 + $0x130] sm:$0xff]
    %v257 = vld [vmem:[#allocation5 + $0x138] sm:$0xff]
    %v258 = vld [vmem:[#allocation5 + $0x140] sm:$0xff]
    %v259 = vld [vmem:[#allocation5 + $0x148] sm:$0xff]
    %v260 = vld [vmem:[#allocation5 + $0x150] sm:$0xff]
    %v261 = vld [vmem:[#allocation5 + $0x158] sm:$0xff]
    %v262 = vld [vmem:[#allocation5 + $0x160] sm:$0xff]
    %v263 = vld [vmem:[#allocation5 + $0x168] sm:$0xff]
    %v264 = vld [vmem:[#allocation5 + $0x170] sm:$0xff]
    %v265 = vld [vmem:[#allocation5 + $0x178] sm:$0xff]
    %v266 = vld [vmem:[#allocation5 + $0x180] sm:$0xff]
    %v267 = vld [vmem:[#allocation5 + $0x188] sm:$0xff]
    %v268 = vld [vmem:[#allocation5 + $0x190] sm:$0xff]
    %v269 = vld [vmem:[#allocation5 + $0x198] sm:$0xff]
    %v270 = vld [vmem:[#allocation5 + $0x1a0] sm:$0xff]
    %v271 = vld [vmem:[#allocation5 + $0x1a8] sm:$0xff]
    %v272 = vld [vmem:[#allocation5 + $0x1b0] sm:$0xff]
    %v273 = vld [vmem:[#allocation5 + $0x1b8] sm:$0xff]
    %v274 = vld [vmem:[#allocation5 + $0x1c0] sm:$0xff]
    %v275 = vld [vmem:[#allocation5 + $0x1c8] sm:$0xff]
    %v276 = vld [vmem:[#allocation5 + $0x1d0] sm:$0xff]
    %v277 = vld [vmem:[#allocation5 + $0x1d8] sm:$0xff]
    %v278 = vld [vmem:[#allocation5 + $0x1e0] sm:$0xff]
    %v279 = vld [vmem:[#allocation5 + $0x1e8] sm:$0xff]
    %v280 = vld [vmem:[#allocation5 + $0x1f0] sm:$0xff]
    %v281 = vld [vmem:[#allocation5 + $0x1f8] sm:$0xff]
    %v282 = vld [vmem:[#allocation5 + $0x200] sm:$0xff]
    %v283 = vld [vmem:[#allocation5 + $0x208] sm:$0xff]
    %v284 = vld [vmem:[#allocation5 + $0x210] sm:$0xff]
    %v285 = vld [vmem:[#allocation5 + $0x218] sm:$0xff]
    %v286 = vld [vmem:[#allocation5 + $0x220] sm:$0xff]
    %v287 = vld [vmem:[#allocation5 + $0x228] sm:$0xff]
    %v288 = vld [vmem:[#allocation5 + $0x230] sm:$0xff]
    %v289 = vld [vmem:[#allocation5 + $0x238] sm:$0xff]
    %v290 = vld [vmem:[#allocation5 + $0x240] sm:$0xff]
    %v291 = vld [vmem:[#allocation5 + $0x248] sm:$0xff]
    %v292 = vld [vmem:[#allocation5 + $0x250] sm:$0xff]
    %v293 = vld [vmem:[#allocation5 + $0x258] sm:$0xff]
    %v294 = vld [vmem:[#allocation5 + $0x260] sm:$0xff]
    %v295 = vld [vmem:[#allocation5 + $0x268] sm:$0xff]
    %v296 = vld [vmem:[#allocation5 + $0x270] sm:$0xff]
    %v297 = vld [vmem:[#allocation5 + $0x278] sm:$0xff]
    %v298 = vld [vmem:[#allocation5 + $0x280] sm:$0xff]
    %v299 = vld [vmem:[#allocation5 + $0x288] sm:$0xff]
    %v300 = vld [vmem:[#allocation5 + $0x290] sm:$0xff]
    %v301 = vld [vmem:[#allocation5 + $0x298] sm:$0xff]
    %v302 = vld [vmem:[#allocation5 + $0x2a0] sm:$0xff]
    %v303 = vld [vmem:[#allocation5 + $0x2a8] sm:$0xff]
    %v304 = vld [vmem:[#allocation5 + $0x2b0] sm:$0xff]
    %v305 = vld [vmem:[#allocation5 + $0x2b8] sm:$0xff]
    %v306 = vld [vmem:[#allocation5 + $0x2c0] sm:$0xff]
    %v307 = vld [vmem:[#allocation5 + $0x2c8] sm:$0xff]
    %v308 = vld [vmem:[#allocation5 + $0x2d0] sm:$0xff]
    %v309 = vld [vmem:[#allocation5 + $0x2d8] sm:$0xff]
    %v310 = vld [vmem:[#allocation5 + $0x2e0] sm:$0xff]
    %v311 = vld [vmem:[#allocation5 + $0x2e8] sm:$0xff]
    %v312 = vld [vmem:[#allocation5 + $0x2f0] sm:$0xff]
    %v313 = vld [vmem:[#allocation5 + $0x2f8] sm:$0xff]
    %v314 = vld [vmem:[#allocation5 + $0x300] sm:$0xff]
    %v315 = vld [vmem:[#allocation5 + $0x308] sm:$0xff]
    %v316 = vld [vmem:[#allocation5 + $0x310] sm:$0xff]
    %v317 = vld [vmem:[#allocation5 + $0x318] sm:$0xff]
    %v318 = vld [vmem:[#allocation5 + $0x320] sm:$0xff]
    %v319 = vld [vmem:[#allocation5 + $0x328] sm:$0xff]
    %v320 = vld [vmem:[#allocation5 + $0x330] sm:$0xff]
    %v321 = vld [vmem:[#allocation5 + $0x338] sm:$0xff]
    %v322 = vld [vmem:[#allocation5 + $0x340] sm:$0xff]
    %v323 = vld [vmem:[#allocation5 + $0x348] sm:$0xff]
    %v324 = vld [vmem:[#allocation5 + $0x350] sm:$0xff]
    %v325 = vld [vmem:[#allocation5 + $0x358] sm:$0xff]
    %v326 = vld [vmem:[#allocation5 + $0x360] sm:$0xff]
    %v327 = vld [vmem:[#allocation5 + $0x368] sm:$0xff]
    %v328 = vld [vmem:[#allocation5 + $0x370] sm:$0xff]
    %v329 = vld [vmem:[#allocation5 + $0x378] sm:$0xff]
    %v330 = vld [vmem:[#allocation5 + $0x380] sm:$0xff]
    %v331 = vld [vmem:[#allocation5 + $0x388] sm:$0xff]
    %v332 = vld [vmem:[#allocation5 + $0x390] sm:$0xff]
    %v333 = vld [vmem:[#allocation5 + $0x398] sm:$0xff]
    %v334 = vld [vmem:[#allocation5 + $0x3a0] sm:$0xff]
    %v335 = vld [vmem:[#allocation5 + $0x3a8] sm:$0xff]
    %v336 = vld [vmem:[#allocation5 + $0x3b0] sm:$0xff]
    %v337 = vld [vmem:[#allocation5 + $0x3b8] sm:$0xff]
    %v338 = vld [vmem:[#allocation5 + $0x3c0] sm:$0xff]
    %v339 = vld [vmem:[#allocation5 + $0x3c8] sm:$0xff]
    %v340 = vld [vmem:[#allocation5 + $0x3d0] sm:$0xff]
    %v341 = vld [vmem:[#allocation5 + $0x3d8] sm:$0xff]
    %v342 = vld [vmem:[#allocation5 + $0x3e0] sm:$0xff]
    %v343 = vld [vmem:[#allocation5 + $0x3e8] sm:$0xff]
    %v344 = vld [vmem:[#allocation5 + $0x3f0] sm:$0xff]
    %v345 = vld [vmem:[#allocation5 + $0x3f8] sm:$0xff]
    %v346 = vld [vmem:[#allocation7] sm:$0xf]
    %v348 = vperm.slane %v346, 0
    %v349 = vperm.slane %v346, 1
    %v350 = vperm.slane %v346, 2
    %v351 = vperm.slane %v346, 3
    %v484 = vunpack.c.l.b16 %v218
    %v485 = vunpack.c.h.b16 %v218
    %v486 = vunpack.c.l.b16 %v219
    %v487 = vunpack.c.h.b16 %v219
    %v488 = vunpack.c.l.b16 %v220
    %v489 = vunpack.c.h.b16 %v220
    %v490 = vunpack.c.l.b16 %v221
    %v491 = vunpack.c.h.b16 %v221
    %v492 = vunpack.c.l.b16 %v222
    %v493 = vunpack.c.h.b16 %v222
    %v494 = vunpack.c.l.b16 %v223
    %v495 = vunpack.c.h.b16 %v223
    %v496 = vunpack.c.l.b16 %v224
    %v497 = vunpack.c.h.b16 %v224
    %v498 = vunpack.c.l.b16 %v225
    %v499 = vunpack.c.h.b16 %v225
    %v500 = vunpack.c.l.b16 %v226
    %v501 = vunpack.c.h.b16 %v226
    %v502 = vunpack.c.l.b16 %v227
    %v503 = vunpack.c.h.b16 %v227
    %v504 = vunpack.c.l.b16 %v228
    %v505 = vunpack.c.h.b16 %v228
    %v506 = vunpack.c.l.b16 %v229
    %v507 = vunpack.c.h.b16 %v229
    %v508 = vunpack.c.l.b16 %v230
    %v509 = vunpack.c.h.b16 %v230
    %v510 = vunpack.c.l.b16 %v231
    %v511 = vunpack.c.h.b16 %v231
    %v512 = vunpack.c.l.b16 %v232
    %v513 = vunpack.c.h.b16 %v232
    %v514 = vunpack.c.l.b16 %v233
    %v515 = vunpack.c.h.b16 %v233
    %v516 = vunpack.c.l.b16 %v234
    %v517 = vunpack.c.h.b16 %v234
    %v518 = vunpack.c.l.b16 %v235
    %v519 = vunpack.c.h.b16 %v235
    %v520 = vunpack.c.l.b16 %v236
    %v521 = vunpack.c.h.b16 %v236
    %v522 = vunpack.c.l.b16 %v237
    %v523 = vunpack.c.h.b16 %v237
    %v524 = vunpack.c.l.b16 %v238
    %v525 = vunpack.c.h.b16 %v238
    %v526 = vunpack.c.l.b16 %v239
    %v527 = vunpack.c.h.b16 %v239
    %v528 = vunpack.c.l.b16 %v240
    %v529 = vunpack.c.h.b16 %v240
    %v530 = vunpack.c.l.b16 %v241
    %v531 = vunpack.c.h.b16 %v241
    %v532 = vunpack.c.l.b16 %v242
    %v533 = vunpack.c.h.b16 %v242
    %v534 = vunpack.c.l.b16 %v243
    %v535 = vunpack.c.h.b16 %v243
    %v536 = vunpack.c.l.b16 %v244
    %v537 = vunpack.c.h.b16 %v244
    %v538 = vunpack.c.l.b16 %v245
    %v539 = vunpack.c.h.b16 %v245
    %v540 = vunpack.c.l.b16 %v246
    %v541 = vunpack.c.h.b16 %v246
    %v542 = vunpack.c.l.b16 %v247
    %v543 = vunpack.c.h.b16 %v247
    %v544 = vunpack.c.l.b16 %v248
    %v545 = vunpack.c.h.b16 %v248
    %v546 = vunpack.c.l.b16 %v249
    %v547 = vunpack.c.h.b16 %v249
    %v548 = vunpack.c.l.b16 %v250
    %v549 = vunpack.c.h.b16 %v250
    %v550 = vunpack.c.l.b16 %v251
    %v551 = vunpack.c.h.b16 %v251
    %v552 = vunpack.c.l.b16 %v252
    %v553 = vunpack.c.h.b16 %v252
    %v554 = vunpack.c.l.b16 %v253
    %v555 = vunpack.c.h.b16 %v253
    %v556 = vunpack.c.l.b16 %v254
    %v557 = vunpack.c.h.b16 %v254
    %v558 = vunpack.c.l.b16 %v255
    %v559 = vunpack.c.h.b16 %v255
    %v560 = vunpack.c.l.b16 %v256
    %v561 = vunpack.c.h.b16 %v256
    %v562 = vunpack.c.l.b16 %v257
    %v563 = vunpack.c.h.b16 %v257
    %v564 = vunpack.c.l.b16 %v258
    %v565 = vunpack.c.h.b16 %v258
    %v566 = vunpack.c.l.b16 %v259
    %v567 = vunpack.c.h.b16 %v259
    %v568 = vunpack.c.l.b16 %v260
    %v569 = vunpack.c.h.b16 %v260
    %v570 = vunpack.c.l.b16 %v261
    %v571 = vunpack.c.h.b16 %v261
    %v572 = vunpack.c.l.b16 %v262
    %v573 = vunpack.c.h.b16 %v262
    %v574 = vunpack.c.l.b16 %v263
    %v575 = vunpack.c.h.b16 %v263
    %v576 = vunpack.c.l.b16 %v264
    %v577 = vunpack.c.h.b16 %v264
    %v578 = vunpack.c.l.b16 %v265
    %v579 = vunpack.c.h.b16 %v265
    %v580 = vunpack.c.l.b16 %v266
    %v581 = vunpack.c.h.b16 %v266
    %v582 = vunpack.c.l.b16 %v267
    %v583 = vunpack.c.h.b16 %v267
    %v584 = vunpack.c.l.b16 %v268
    %v585 = vunpack.c.h.b16 %v268
    %v586 = vunpack.c.l.b16 %v269
    %v587 = vunpack.c.h.b16 %v269
    %v588 = vunpack.c.l.b16 %v270
    %v589 = vunpack.c.h.b16 %v270
    %v590 = vunpack.c.l.b16 %v271
    %v591 = vunpack.c.h.b16 %v271
    %v592 = vunpack.c.l.b16 %v272
    %v593 = vunpack.c.h.b16 %v272
    %v594 = vunpack.c.l.b16 %v273
    %v595 = vunpack.c.h.b16 %v273
    %v596 = vunpack.c.l.b16 %v274
    %v597 = vunpack.c.h.b16 %v274
    %v598 = vunpack.c.l.b16 %v275
    %v599 = vunpack.c.h.b16 %v275
    %v600 = vunpack.c.l.b16 %v276
    %v601 = vunpack.c.h.b16 %v276
    %v602 = vunpack.c.l.b16 %v277
    %v603 = vunpack.c.h.b16 %v277
    %v604 = vunpack.c.l.b16 %v278
    %v605 = vunpack.c.h.b16 %v278
    %v606 = vunpack.c.l.b16 %v279
    %v607 = vunpack.c.h.b16 %v279
    %v608 = vunpack.c.l.b16 %v280
    %v609 = vunpack.c.h.b16 %v280
    %v610 = vunpack.c.l.b16 %v281
    %v611 = vunpack.c.h.b16 %v281
    %v612 = vunpack.c.l.b16 %v282
    %v613 = vunpack.c.h.b16 %v282
    %v614 = vunpack.c.l.b16 %v283
    %v615 = vunpack.c.h.b16 %v283
    %v616 = vunpack.c.l.b16 %v284
    %v617 = vunpack.c.h.b16 %v284
    %v618 = vunpack.c.l.b16 %v285
    %v619 = vunpack.c.h.b16 %v285
    %v620 = vunpack.c.l.b16 %v286
    %v621 = vunpack.c.h.b16 %v286
    %v622 = vunpack.c.l.b16 %v287
    %v623 = vunpack.c.h.b16 %v287
    %v624 = vunpack.c.l.b16 %v288
    %v625 = vunpack.c.h.b16 %v288
    %v626 = vunpack.c.l.b16 %v289
    %v627 = vunpack.c.h.b16 %v289
    %v628 = vunpack.c.l.b16 %v290
    %v629 = vunpack.c.h.b16 %v290
    %v630 = vunpack.c.l.b16 %v291
    %v631 = vunpack.c.h.b16 %v291
    %v632 = vunpack.c.l.b16 %v292
    %v633 = vunpack.c.h.b16 %v292
    %v634 = vunpack.c.l.b16 %v293
    %v635 = vunpack.c.h.b16 %v293
    %v636 = vunpack.c.l.b16 %v294
    %v637 = vunpack.c.h.b16 %v294
    %v638 = vunpack.c.l.b16 %v295
    %v639 = vunpack.c.h.b16 %v295
    %v640 = vunpack.c.l.b16 %v296
    %v641 = vunpack.c.h.b16 %v296
    %v642 = vunpack.c.l.b16 %v297
    %v643 = vunpack.c.h.b16 %v297
    %v644 = vunpack.c.l.b16 %v298
    %v645 = vunpack.c.h.b16 %v298
    %v646 = vunpack.c.l.b16 %v299
    %v647 = vunpack.c.h.b16 %v299
    %v648 = vunpack.c.l.b16 %v300
    %v649 = vunpack.c.h.b16 %v300
    %v650 = vunpack.c.l.b16 %v301
    %v651 = vunpack.c.h.b16 %v301
    %v652 = vunpack.c.l.b16 %v302
    %v653 = vunpack.c.h.b16 %v302
    %v654 = vunpack.c.l.b16 %v303
    %v655 = vunpack.c.h.b16 %v303
    %v656 = vunpack.c.l.b16 %v304
    %v657 = vunpack.c.h.b16 %v304
    %v658 = vunpack.c.l.b16 %v305
    %v659 = vunpack.c.h.b16 %v305
    %v660 = vunpack.c.l.b16 %v306
    %v661 = vunpack.c.h.b16 %v306
    %v662 = vunpack.c.l.b16 %v307
    %v663 = vunpack.c.h.b16 %v307
    %v664 = vunpack.c.l.b16 %v308
    %v665 = vunpack.c.h.b16 %v308
    %v666 = vunpack.c.l.b16 %v309
    %v667 = vunpack.c.h.b16 %v309
    %v668 = vunpack.c.l.b16 %v310
    %v669 = vunpack.c.h.b16 %v310
    %v670 = vunpack.c.l.b16 %v311
    %v671 = vunpack.c.h.b16 %v311
    %v672 = vunpack.c.l.b16 %v312
    %v673 = vunpack.c.h.b16 %v312
    %v674 = vunpack.c.l.b16 %v313
    %v675 = vunpack.c.h.b16 %v313
    %v676 = vunpack.c.l.b16 %v314
    %v677 = vunpack.c.h.b16 %v314
    %v678 = vunpack.c.l.b16 %v315
    %v679 = vunpack.c.h.b16 %v315
    %v680 = vunpack.c.l.b16 %v316
    %v681 = vunpack.c.h.b16 %v316
    %v682 = vunpack.c.l.b16 %v317
    %v683 = vunpack.c.h.b16 %v317
    %v684 = vunpack.c.l.b16 %v318
    %v685 = vunpack.c.h.b16 %v318
    %v686 = vunpack.c.l.b16 %v319
    %v687 = vunpack.c.h.b16 %v319
    %v688 = vunpack.c.l.b16 %v320
    %v689 = vunpack.c.h.b16 %v320
    %v690 = vunpack.c.l.b16 %v321
    %v691 = vunpack.c.h.b16 %v321
    %v692 = vunpack.c.l.b16 %v322
    %v693 = vunpack.c.h.b16 %v322
    %v694 = vunpack.c.l.b16 %v323
    %v695 = vunpack.c.h.b16 %v323
    %v696 = vunpack.c.l.b16 %v324
    %v697 = vunpack.c.h.b16 %v324
    %v698 = vunpack.c.l.b16 %v325
    %v699 = vunpack.c.h.b16 %v325
    %v700 = vunpack.c.l.b16 %v326
    %v701 = vunpack.c.h.b16 %v326
    %v702 = vunpack.c.l.b16 %v327
    %v703 = vunpack.c.h.b16 %v327
    %v704 = vunpack.c.l.b16 %v328
    %v705 = vunpack.c.h.b16 %v328
    %v706 = vunpack.c.l.b16 %v329
    %v707 = vunpack.c.h.b16 %v329
    %v708 = vunpack.c.l.b16 %v330
    %v709 = vunpack.c.h.b16 %v330
    %v710 = vunpack.c.l.b16 %v331
    %v711 = vunpack.c.h.b16 %v331
    %v712 = vunpack.c.l.b16 %v332
    %v713 = vunpack.c.h.b16 %v332
    %v714 = vunpack.c.l.b16 %v333
    %v715 = vunpack.c.h.b16 %v333
    %v716 = vunpack.c.l.b16 %v334
    %v717 = vunpack.c.h.b16 %v334
    %v718 = vunpack.c.l.b16 %v335
    %v719 = vunpack.c.h.b16 %v335
    %v720 = vunpack.c.l.b16 %v336
    %v721 = vunpack.c.h.b16 %v336
    %v722 = vunpack.c.l.b16 %v337
    %v723 = vunpack.c.h.b16 %v337
    %v724 = vunpack.c.l.b16 %v338
    %v725 = vunpack.c.h.b16 %v338
    %v726 = vunpack.c.l.b16 %v339
    %v727 = vunpack.c.h.b16 %v339
    %v728 = vunpack.c.l.b16 %v340
    %v729 = vunpack.c.h.b16 %v340
    %v730 = vunpack.c.l.b16 %v341
    %v731 = vunpack.c.h.b16 %v341
    %v732 = vunpack.c.l.b16 %v342
    %v733 = vunpack.c.h.b16 %v342
    %v734 = vunpack.c.l.b16 %v343
    %v735 = vunpack.c.h.b16 %v343
    %v736 = vunpack.c.l.b16 %v344
    %v737 = vunpack.c.h.b16 %v344
    %v738 = vunpack.c.l.b16 %v345
    %v739 = vunpack.c.h.b16 %v345
    %v740 = vpack.c.b16 %v488, %v484
    %v741 = vpack.c.b16 %v489, %v485
    %v742 = vpack.c.b16 %v490, %v486
    %v743 = vpack.c.b16 %v491, %v487
    %v744 = vpack.c.b16 %v496, %v492
    %v745 = vpack.c.b16 %v497, %v493
    %v746 = vpack.c.b16 %v498, %v494
    %v747 = vpack.c.b16 %v499, %v495
    %v748 = vpack.c.b16 %v504, %v500
    %v749 = vpack.c.b16 %v505, %v501
    %v750 = vpack.c.b16 %v506, %v502
    %v751 = vpack.c.b16 %v507, %v503
    %v752 = vpack.c.b16 %v512, %v508
    %v753 = vpack.c.b16 %v513, %v509
    %v754 = vpack.c.b16 %v514, %v510
    %v755 = vpack.c.b16 %v515, %v511
    %v756 = vpack.c.b16 %v520, %v516
    %v757 = vpack.c.b16 %v521, %v517
    %v758 = vpack.c.b16 %v522, %v518
    %v759 = vpack.c.b16 %v523, %v519
    %v760 = vpack.c.b16 %v528, %v524
    %v761 = vpack.c.b16 %v529, %v525
    %v762 = vpack.c.b16 %v530, %v526
    %v763 = vpack.c.b16 %v531, %v527
    %v764 = vpack.c.b16 %v536, %v532
    %v765 = vpack.c.b16 %v537, %v533
    %v766 = vpack.c.b16 %v538, %v534
    %v767 = vpack.c.b16 %v539, %v535
    %v768 = vpack.c.b16 %v544, %v540
    %v769 = vpack.c.b16 %v545, %v541
    %v770 = vpack.c.b16 %v546, %v542
    %v771 = vpack.c.b16 %v547, %v543
    %v772 = vpack.c.b16 %v552, %v548
    %v773 = vpack.c.b16 %v553, %v549
    %v774 = vpack.c.b16 %v554, %v550
    %v775 = vpack.c.b16 %v555, %v551
    %v776 = vpack.c.b16 %v560, %v556
    %v777 = vpack.c.b16 %v561, %v557
    %v778 = vpack.c.b16 %v562, %v558
    %v779 = vpack.c.b16 %v563, %v559
    %v780 = vpack.c.b16 %v568, %v564
    %v781 = vpack.c.b16 %v569, %v565
    %v782 = vpack.c.b16 %v570, %v566
    %v783 = vpack.c.b16 %v571, %v567
    %v784 = vpack.c.b16 %v576, %v572
    %v785 = vpack.c.b16 %v577, %v573
    %v786 = vpack.c.b16 %v578, %v574
    %v787 = vpack.c.b16 %v579, %v575
    %v788 = vpack.c.b16 %v584, %v580
    %v789 = vpack.c.b16 %v585, %v581
    %v790 = vpack.c.b16 %v586, %v582
    %v791 = vpack.c.b16 %v587, %v583
    %v792 = vpack.c.b16 %v592, %v588
    %v793 = vpack.c.b16 %v593, %v589
    %v794 = vpack.c.b16 %v594, %v590
    %v795 = vpack.c.b16 %v595, %v591
    %v796 = vpack.c.b16 %v600, %v596
    %v797 = vpack.c.b16 %v601, %v597
    %v798 = vpack.c.b16 %v602, %v598
    %v799 = vpack.c.b16 %v603, %v599
    %v800 = vpack.c.b16 %v608, %v604
    %v801 = vpack.c.b16 %v609, %v605
    %v802 = vpack.c.b16 %v610, %v606
    %v803 = vpack.c.b16 %v611, %v607
    %v804 = vpack.c.b16 %v616, %v612
    %v805 = vpack.c.b16 %v617, %v613
    %v806 = vpack.c.b16 %v618, %v614
    %v807 = vpack.c.b16 %v619, %v615
    %v808 = vpack.c.b16 %v624, %v620
    %v809 = vpack.c.b16 %v625, %v621
    %v810 = vpack.c.b16 %v626, %v622
    %v811 = vpack.c.b16 %v627, %v623
    %v812 = vpack.c.b16 %v632, %v628
    %v813 = vpack.c.b16 %v633, %v629
    %v814 = vpack.c.b16 %v634, %v630
    %v815 = vpack.c.b16 %v635, %v631
    %v816 = vpack.c.b16 %v640, %v636
    %v817 = vpack.c.b16 %v641, %v637
    %v818 = vpack.c.b16 %v642, %v638
    %v819 = vpack.c.b16 %v643, %v639
    %v820 = vpack.c.b16 %v648, %v644
    %v821 = vpack.c.b16 %v649, %v645
    %v822 = vpack.c.b16 %v650, %v646
    %v823 = vpack.c.b16 %v651, %v647
    %v824 = vpack.c.b16 %v656, %v652
    %v825 = vpack.c.b16 %v657, %v653
    %v826 = vpack.c.b16 %v658, %v654
    %v827 = vpack.c.b16 %v659, %v655
    %v828 = vpack.c.b16 %v664, %v660
    %v829 = vpack.c.b16 %v665, %v661
    %v830 = vpack.c.b16 %v666, %v662
    %v831 = vpack.c.b16 %v667, %v663
    %v832 = vpack.c.b16 %v672, %v668
    %v833 = vpack.c.b16 %v673, %v669
    %v834 = vpack.c.b16 %v674, %v670
    %v835 = vpack.c.b16 %v675, %v671
    %v836 = vpack.c.b16 %v680, %v676
    %v837 = vpack.c.b16 %v681, %v677
    %v838 = vpack.c.b16 %v682, %v678
    %v839 = vpack.c.b16 %v683, %v679
    %v840 = vpack.c.b16 %v688, %v684
    %v841 = vpack.c.b16 %v689, %v685
    %v842 = vpack.c.b16 %v690, %v686
    %v843 = vpack.c.b16 %v691, %v687
    %v844 = vpack.c.b16 %v696, %v692
    %v845 = vpack.c.b16 %v697, %v693
    %v846 = vpack.c.b16 %v698, %v694
    %v847 = vpack.c.b16 %v699, %v695
    %v848 = vpack.c.b16 %v704, %v700
    %v849 = vpack.c.b16 %v705, %v701
    %v850 = vpack.c.b16 %v706, %v702
    %v851 = vpack.c.b16 %v707, %v703
    %v852 = vpack.c.b16 %v712, %v708
    %v853 = vpack.c.b16 %v713, %v709
    %v854 = vpack.c.b16 %v714, %v710
    %v855 = vpack.c.b16 %v715, %v711
    %v856 = vpack.c.b16 %v720, %v716
    %v857 = vpack.c.b16 %v721, %v717
    %v858 = vpack.c.b16 %v722, %v718
    %v859 = vpack.c.b16 %v723, %v719
    %v860 = vpack.c.b16 %v728, %v724
    %v861 = vpack.c.b16 %v729, %v725
    %v862 = vpack.c.b16 %v730, %v726
    %v863 = vpack.c.b16 %v731, %v727
    %v864 = vpack.c.b16 %v736, %v732
    %v865 = vpack.c.b16 %v737, %v733
    %v866 = vpack.c.b16 %v738, %v734
    %v867 = vpack.c.b16 %v739, %v735
    %996 = vmatpush.bf16.msra.mxu0 %v768
    %997 = vmatpush.bf16.msra.mxu0 %v764
    %998 = vmatpush.bf16.msra.mxu0 %v760
    %999 = vmatpush.bf16.msra.mxu0 %v756
    %1000 = vmatpush.bf16.msra.mxu0 %v752
    %1001 = vmatpush.bf16.msra.mxu0 %v748
    %1002 = vmatpush.bf16.msra.mxu0 %v744
    %1003 = vmatpush.bf16.msra.mxu0 %v740
    %1004 = vmatmul.bf16.gmra.mxu0 %v214
    %v1005 = vpop.f32.mrf.mxu0
    %v1006 = vadd.f32 %v348, %v1005
    %v1007 = vpop.f32.mrf.mxu0
    %1008 = vdwg.mxu0
    %1009 = vmatpush.bf16.msra.mxu0 %v800
    %1010 = vmatpush.bf16.msra.mxu0 %v796
    %1011 = vmatpush.bf16.msra.mxu0 %v792
    %1012 = vmatpush.bf16.msra.mxu0 %v788
    %1013 = vmatpush.bf16.msra.mxu0 %v784
    %1014 = vmatpush.bf16.msra.mxu0 %v780
    %1015 = vmatpush.bf16.msra.mxu0 %v776
    %1016 = vmatpush.bf16.msra.mxu0 %v772
    %1017 = vmatmul.bf16.gmra.mxu0 %v215
    %v1018 = vpop.f32.mrf.mxu0
    %v1019 = vadd.f32 %v1006, %v1018
    %v1020 = vpop.f32.mrf.mxu0
    %1021 = vdwg.mxu0
    %1022 = vmatpush.bf16.msra.mxu0 %v832
    %1023 = vmatpush.bf16.msra.mxu0 %v828
    %1024 = vmatpush.bf16.msra.mxu0 %v824
    %1025 = vmatpush.bf16.msra.mxu0 %v820
    %1026 = vmatpush.bf16.msra.mxu0 %v816
    %1027 = vmatpush.bf16.msra.mxu0 %v812
    %1028 = vmatpush.bf16.msra.mxu0 %v808
    %1029 = vmatpush.bf16.msra.mxu0 %v804
    %1030 = vmatmul.bf16.gmra.mxu0 %v216
    %v1031 = vpop.f32.mrf.mxu0
    %v1032 = vadd.f32 %v1019, %v1031
    %v1033 = vpop.f32.mrf.mxu0
    %1034 = vdwg.mxu0
    %1035 = vmatpush.bf16.msra.mxu0 %v864
    %1036 = vmatpush.bf16.msra.mxu0 %v860
    %1037 = vmatpush.bf16.msra.mxu0 %v856
    %1038 = vmatpush.bf16.msra.mxu0 %v852
    %1039 = vmatpush.bf16.msra.mxu0 %v848
    %1040 = vmatpush.bf16.msra.mxu0 %v844
    %1041 = vmatpush.bf16.msra.mxu0 %v840
    %1042 = vmatpush.bf16.msra.mxu0 %v836
    %1043 = vmatmul.bf16.gmra.mxu0 %v217
    %v1044 = vpop.f32.mrf.mxu0
    %v1045 = vadd.f32 %v1032, %v1044
    %v1046 = vpop.f32.mrf.mxu0
    %1047 = vdwg.mxu0
    %1048 = vmatpush.bf16.msra.mxu0 %v769
    %1049 = vmatpush.bf16.msra.mxu0 %v765
    %1050 = vmatpush.bf16.msra.mxu0 %v761
    %1051 = vmatpush.bf16.msra.mxu0 %v757
    %1052 = vmatpush.bf16.msra.mxu0 %v753
    %1053 = vmatpush.bf16.msra.mxu0 %v749
    %1054 = vmatpush.bf16.msra.mxu0 %v745
    %1055 = vmatpush.bf16.msra.mxu0 %v741
    %1056 = vmatmul.bf16.gmra.mxu0 %v214
    %v1057 = vpop.f32.mrf.mxu0
    %v1058 = vadd.f32 %v349, %v1057
    %v1059 = vpop.f32.mrf.mxu0
    %1060 = vdwg.mxu0
    %1061 = vmatpush.bf16.msra.mxu0 %v801
    %1062 = vmatpush.bf16.msra.mxu0 %v797
    %1063 = vmatpush.bf16.msra.mxu0 %v793
    %1064 = vmatpush.bf16.msra.mxu0 %v789
    %1065 = vmatpush.bf16.msra.mxu0 %v785
    %1066 = vmatpush.bf16.msra.mxu0 %v781
    %1067 = vmatpush.bf16.msra.mxu0 %v777
    %1068 = vmatpush.bf16.msra.mxu0 %v773
    %1069 = vmatmul.bf16.gmra.mxu0 %v215
    %v1070 = vpop.f32.mrf.mxu0
    %v1071 = vadd.f32 %v1058, %v1070
    %v1072 = vpop.f32.mrf.mxu0
    %1073 = vdwg.mxu0
    %1074 = vmatpush.bf16.msra.mxu0 %v833
    %1075 = vmatpush.bf16.msra.mxu0 %v829
    %1076 = vmatpush.bf16.msra.mxu0 %v825
    %1077 = vmatpush.bf16.msra.mxu0 %v821
    %1078 = vmatpush.bf16.msra.mxu0 %v817
    %1079 = vmatpush.bf16.msra.mxu0 %v813
    %1080 = vmatpush.bf16.msra.mxu0 %v809
    %1081 = vmatpush.bf16.msra.mxu0 %v805
    %1082 = vmatmul.bf16.gmra.mxu0 %v216
    %v1083 = vpop.f32.mrf.mxu0
    %v1084 = vadd.f32 %v1071, %v1083
    %v1085 = vpop.f32.mrf.mxu0
    %1086 = vdwg.mxu0
    %1087 = vmatpush.bf16.msra.mxu0 %v865
    %1088 = vmatpush.bf16.msra.mxu0 %v861
    %1089 = vmatpush.bf16.msra.mxu0 %v857
    %1090 = vmatpush.bf16.msra.mxu0 %v853
    %1091 = vmatpush.bf16.msra.mxu0 %v849
    %1092 = vmatpush.bf16.msra.mxu0 %v845
    %1093 = vmatpush.bf16.msra.mxu0 %v841
    %1094 = vmatpush.bf16.msra.mxu0 %v837
    %1095 = vmatmul.bf16.gmra.mxu0 %v217
    %v1096 = vpop.f32.mrf.mxu0
    %v1097 = vadd.f32 %v1084, %v1096
    %v1098 = vpop.f32.mrf.mxu0
    %1099 = vdwg.mxu0
    %1100 = vmatpush.bf16.msra.mxu0 %v770
    %1101 = vmatpush.bf16.msra.mxu0 %v766
    %1102 = vmatpush.bf16.msra.mxu0 %v762
    %1103 = vmatpush.bf16.msra.mxu0 %v758
    %1104 = vmatpush.bf16.msra.mxu0 %v754
    %1105 = vmatpush.bf16.msra.mxu0 %v750
    %1106 = vmatpush.bf16.msra.mxu0 %v746
    %1107 = vmatpush.bf16.msra.mxu0 %v742
    %1108 = vmatmul.bf16.gmra.mxu0 %v214
    %v1109 = vpop.f32.mrf.mxu0
    %v1110 = vadd.f32 %v350, %v1109
    %v1111 = vpop.f32.mrf.mxu0
    %1112 = vdwg.mxu0
    %1113 = vmatpush.bf16.msra.mxu0 %v802
    %1114 = vmatpush.bf16.msra.mxu0 %v798
    %1115 = vmatpush.bf16.msra.mxu0 %v794
    %1116 = vmatpush.bf16.msra.mxu0 %v790
    %1117 = vmatpush.bf16.msra.mxu0 %v786
    %1118 = vmatpush.bf16.msra.mxu0 %v782
    %1119 = vmatpush.bf16.msra.mxu0 %v778
    %1120 = vmatpush.bf16.msra.mxu0 %v774
    %1121 = vmatmul.bf16.gmra.mxu0 %v215
    %v1122 = vpop.f32.mrf.mxu0
    %v1123 = vadd.f32 %v1110, %v1122
    %v1124 = vpop.f32.mrf.mxu0
    %1125 = vdwg.mxu0
    %1126 = vmatpush.bf16.msra.mxu0 %v834
    %1127 = vmatpush.bf16.msra.mxu0 %v830
    %1128 = vmatpush.bf16.msra.mxu0 %v826
    %1129 = vmatpush.bf16.msra.mxu0 %v822
    %1130 = vmatpush.bf16.msra.mxu0 %v818
    %1131 = vmatpush.bf16.msra.mxu0 %v814
    %1132 = vmatpush.bf16.msra.mxu0 %v810
    %1133 = vmatpush.bf16.msra.mxu0 %v806
    %1134 = vmatmul.bf16.gmra.mxu0 %v216
    %v1135 = vpop.f32.mrf.mxu0
    %v1136 = vadd.f32 %v1123, %v1135
    %v1137 = vpop.f32.mrf.mxu0
    %1138 = vdwg.mxu0
    %1139 = vmatpush.bf16.msra.mxu0 %v866
    %1140 = vmatpush.bf16.msra.mxu0 %v862
    %1141 = vmatpush.bf16.msra.mxu0 %v858
    %1142 = vmatpush.bf16.msra.mxu0 %v854
    %1143 = vmatpush.bf16.msra.mxu0 %v850
    %1144 = vmatpush.bf16.msra.mxu0 %v846
    %1145 = vmatpush.bf16.msra.mxu0 %v842
    %1146 = vmatpush.bf16.msra.mxu0 %v838
    %1147 = vmatmul.bf16.gmra.mxu0 %v217
    %v1148 = vpop.f32.mrf.mxu0
    %v1149 = vadd.f32 %v1136, %v1148
    %v1150 = vpop.f32.mrf.mxu0
    %1151 = vdwg.mxu0
    %1152 = vmatpush.bf16.msra.mxu0 %v771
    %1153 = vmatpush.bf16.msra.mxu0 %v767
    %1154 = vmatpush.bf16.msra.mxu0 %v763
    %1155 = vmatpush.bf16.msra.mxu0 %v759
    %1156 = vmatpush.bf16.msra.mxu0 %v755
    %1157 = vmatpush.bf16.msra.mxu0 %v751
    %1158 = vmatpush.bf16.msra.mxu0 %v747
    %1159 = vmatpush.bf16.msra.mxu0 %v743
    %1160 = vmatmul.bf16.gmra.mxu0 %v214
    %v1161 = vpop.f32.mrf.mxu0
    %v1162 = vadd.f32 %v351, %v1161
    %v1163 = vpop.f32.mrf.mxu0
    %1164 = vdwg.mxu0
    %1165 = vmatpush.bf16.msra.mxu0 %v803
    %1166 = vmatpush.bf16.msra.mxu0 %v799
    %1167 = vmatpush.bf16.msra.mxu0 %v795
    %1168 = vmatpush.bf16.msra.mxu0 %v791
    %1169 = vmatpush.bf16.msra.mxu0 %v787
    %1170 = vmatpush.bf16.msra.mxu0 %v783
    %1171 = vmatpush.bf16.msra.mxu0 %v779
    %1172 = vmatpush.bf16.msra.mxu0 %v775
    %1173 = vmatmul.bf16.gmra.mxu0 %v215
    %v1174 = vpop.f32.mrf.mxu0
    %v1175 = vadd.f32 %v1162, %v1174
    %v1176 = vpop.f32.mrf.mxu0
    %1177 = vdwg.mxu0
    %1178 = vmatpush.bf16.msra.mxu0 %v835
    %1179 = vmatpush.bf16.msra.mxu0 %v831
    %1180 = vmatpush.bf16.msra.mxu0 %v827
    %1181 = vmatpush.bf16.msra.mxu0 %v823
    %1182 = vmatpush.bf16.msra.mxu0 %v819
    %1183 = vmatpush.bf16.msra.mxu0 %v815
    %1184 = vmatpush.bf16.msra.mxu0 %v811
    %1185 = vmatpush.bf16.msra.mxu0 %v807
    %1186 = vmatmul.bf16.gmra.mxu0 %v216
    %v1187 = vpop.f32.mrf.mxu0
    %v1188 = vadd.f32 %v1175, %v1187
    %v1189 = vpop.f32.mrf.mxu0
    %1190 = vdwg.mxu0
    %1191 = vmatpush.bf16.msra.mxu0 %v867
    %1192 = vmatpush.bf16.msra.mxu0 %v863
    %1193 = vmatpush.bf16.msra.mxu0 %v859
    %1194 = vmatpush.bf16.msra.mxu0 %v855
    %1195 = vmatpush.bf16.msra.mxu0 %v851
    %1196 = vmatpush.bf16.msra.mxu0 %v847
    %1197 = vmatpush.bf16.msra.mxu0 %v843
    %1198 = vmatpush.bf16.msra.mxu0 %v839
    %1199 = vmatmul.bf16.gmra.mxu0 %v217
    %v1200 = vpop.f32.mrf.mxu0
    %v1201 = vadd.f32 %v1188, %v1200
    %v1202 = vpop.f32.mrf.mxu0
    %1203 = vdwg.mxu0
    %v1204 = vmax.f32 %v1045, 0.0
    %v1205 = vmax.f32 %v1097, 0.0
    %v1206 = vmax.f32 %v1149, 0.0
    %v1207 = vmax.f32 %v1201, 0.0
    %v1208 = vpack.c.bf16 %v1204, %v1204
    %v1209 = vpack.c.bf16 %v1205, %v1205
    %v1210 = vpack.c.bf16 %v1206, %v1206
    %v1211 = vpack.c.bf16 %v1207, %v1207
    %v1212 = vld [vmem:[#allocation8] sm:$0xf]
    %v1213 = vld [vmem:[#allocation8 + $0x4] sm:$0xf]
    %v1214 = vld [vmem:[#allocation8 + $0x8] sm:$0xf]
    %v1215 = vld [vmem:[#allocation8 + $0xc] sm:$0xf]
    %v1216 = vld [vmem:[#allocation8 + $0x10] sm:$0xf]
    %v1217 = vld [vmem:[#allocation8 + $0x14] sm:$0xf]
    %v1218 = vld [vmem:[#allocation8 + $0x18] sm:$0xf]
    %v1219 = vld [vmem:[#allocation8 + $0x1c] sm:$0xf]
    %v1220 = vld [vmem:[#allocation8 + $0x20] sm:$0xf]
    %v1221 = vld [vmem:[#allocation8 + $0x24] sm:$0xf]
    %v1222 = vld [vmem:[#allocation8 + $0x28] sm:$0xf]
    %v1223 = vld [vmem:[#allocation8 + $0x2c] sm:$0xf]
    %v1224 = vld [vmem:[#allocation8 + $0x30] sm:$0xf]
    %v1225 = vld [vmem:[#allocation8 + $0x34] sm:$0xf]
    %v1226 = vld [vmem:[#allocation8 + $0x38] sm:$0xf]
    %v1227 = vld [vmem:[#allocation8 + $0x3c] sm:$0xf]
    %v1228 = vld [vmem:[#allocation8 + $0x40] sm:$0xf]
    %v1229 = vld [vmem:[#allocation8 + $0x44] sm:$0xf]
    %v1230 = vld [vmem:[#allocation8 + $0x48] sm:$0xf]
    %v1231 = vld [vmem:[#allocation8 + $0x4c] sm:$0xf]
    %v1232 = vld [vmem:[#allocation8 + $0x50] sm:$0xf]
    %v1233 = vld [vmem:[#allocation8 + $0x54] sm:$0xf]
    %v1234 = vld [vmem:[#allocation8 + $0x58] sm:$0xf]
    %v1235 = vld [vmem:[#allocation8 + $0x5c] sm:$0xf]
    %v1236 = vld [vmem:[#allocation8 + $0x60] sm:$0xf]
    %v1237 = vld [vmem:[#allocation8 + $0x64] sm:$0xf]
    %v1238 = vld [vmem:[#allocation8 + $0x68] sm:$0xf]
    %v1239 = vld [vmem:[#allocation8 + $0x6c] sm:$0xf]
    %v1240 = vld [vmem:[#allocation8 + $0x70] sm:$0xf]
    %v1241 = vld [vmem:[#allocation8 + $0x74] sm:$0xf]
    %v1242 = vld [vmem:[#allocation8 + $0x78] sm:$0xf]
    %v1243 = vld [vmem:[#allocation8 + $0x7c] sm:$0xf]
    %v1244 = vld [vmem:[#allocation8 + $0x80] sm:$0xf]
    %v1245 = vld [vmem:[#allocation8 + $0x84] sm:$0xf]
    %v1246 = vld [vmem:[#allocation8 + $0x88] sm:$0xf]
    %v1247 = vld [vmem:[#allocation8 + $0x8c] sm:$0xf]
    %v1248 = vld [vmem:[#allocation8 + $0x90] sm:$0xf]
    %v1249 = vld [vmem:[#allocation8 + $0x94] sm:$0xf]
    %v1250 = vld [vmem:[#allocation8 + $0x98] sm:$0xf]
    %v1251 = vld [vmem:[#allocation8 + $0x9c] sm:$0xf]
    %v1252 = vld [vmem:[#allocation8 + $0xa0] sm:$0xf]
    %v1253 = vld [vmem:[#allocation8 + $0xa4] sm:$0xf]
    %v1254 = vld [vmem:[#allocation8 + $0xa8] sm:$0xf]
    %v1255 = vld [vmem:[#allocation8 + $0xac] sm:$0xf]
    %v1256 = vld [vmem:[#allocation8 + $0xb0] sm:$0xf]
    %v1257 = vld [vmem:[#allocation8 + $0xb4] sm:$0xf]
    %v1258 = vld [vmem:[#allocation8 + $0xb8] sm:$0xf]
    %v1259 = vld [vmem:[#allocation8 + $0xbc] sm:$0xf]
    %v1260 = vld [vmem:[#allocation8 + $0xc0] sm:$0xf]
    %v1261 = vld [vmem:[#allocation8 + $0xc4] sm:$0xf]
    %v1262 = vld [vmem:[#allocation8 + $0xc8] sm:$0xf]
    %v1263 = vld [vmem:[#allocation8 + $0xcc] sm:$0xf]
    %v1264 = vld [vmem:[#allocation8 + $0xd0] sm:$0xf]
    %v1265 = vld [vmem:[#allocation8 + $0xd4] sm:$0xf]
    %v1266 = vld [vmem:[#allocation8 + $0xd8] sm:$0xf]
    %v1267 = vld [vmem:[#allocation8 + $0xdc] sm:$0xf]
    %v1268 = vld [vmem:[#allocation8 + $0xe0] sm:$0xf]
    %v1269 = vld [vmem:[#allocation8 + $0xe4] sm:$0xf]
    %v1270 = vld [vmem:[#allocation8 + $0xe8] sm:$0xf]
    %v1271 = vld [vmem:[#allocation8 + $0xec] sm:$0xf]
    %v1272 = vld [vmem:[#allocation8 + $0xf0] sm:$0xf]
    %v1273 = vld [vmem:[#allocation8 + $0xf4] sm:$0xf]
    %v1274 = vld [vmem:[#allocation8 + $0xf8] sm:$0xf]
    %v1275 = vld [vmem:[#allocation8 + $0xfc] sm:$0xf]
    %v1276 = vld [vmem:[%s6] sm:$0x1]
    %v1278 = vperm.slane %v1276, 0
    %v1344 = vunpack.c.l.b16 %v1212
    %v1345 = vunpack.c.l.b16 %v1213
    %v1346 = vunpack.c.l.b16 %v1214
    %v1347 = vunpack.c.l.b16 %v1215
    %v1348 = vunpack.c.l.b16 %v1216
    %v1349 = vunpack.c.l.b16 %v1217
    %v1350 = vunpack.c.l.b16 %v1218
    %v1351 = vunpack.c.l.b16 %v1219
    %v1352 = vunpack.c.l.b16 %v1220
    %v1353 = vunpack.c.l.b16 %v1221
    %v1354 = vunpack.c.l.b16 %v1222
    %v1355 = vunpack.c.l.b16 %v1223
    %v1356 = vunpack.c.l.b16 %v1224
    %v1357 = vunpack.c.l.b16 %v1225
    %v1358 = vunpack.c.l.b16 %v1226
    %v1359 = vunpack.c.l.b16 %v1227
    %v1360 = vunpack.c.l.b16 %v1228
    %v1361 = vunpack.c.l.b16 %v1229
    %v1362 = vunpack.c.l.b16 %v1230
    %v1363 = vunpack.c.l.b16 %v1231
    %v1364 = vunpack.c.l.b16 %v1232
    %v1365 = vunpack.c.l.b16 %v1233
    %v1366 = vunpack.c.l.b16 %v1234
    %v1367 = vunpack.c.l.b16 %v1235
    %v1368 = vunpack.c.l.b16 %v1236
    %v1369 = vunpack.c.l.b16 %v1237
    %v1370 = vunpack.c.l.b16 %v1238
    %v1371 = vunpack.c.l.b16 %v1239
    %v1372 = vunpack.c.l.b16 %v1240
    %v1373 = vunpack.c.l.b16 %v1241
    %v1374 = vunpack.c.l.b16 %v1242
    %v1375 = vunpack.c.l.b16 %v1243
    %v1376 = vunpack.c.l.b16 %v1244
    %v1377 = vunpack.c.l.b16 %v1245
    %v1378 = vunpack.c.l.b16 %v1246
    %v1379 = vunpack.c.l.b16 %v1247
    %v1380 = vunpack.c.l.b16 %v1248
    %v1381 = vunpack.c.l.b16 %v1249
    %v1382 = vunpack.c.l.b16 %v1250
    %v1383 = vunpack.c.l.b16 %v1251
    %v1384 = vunpack.c.l.b16 %v1252
    %v1385 = vunpack.c.l.b16 %v1253
    %v1386 = vunpack.c.l.b16 %v1254
    %v1387 = vunpack.c.l.b16 %v1255
    %v1388 = vunpack.c.l.b16 %v1256
    %v1389 = vunpack.c.l.b16 %v1257
    %v1390 = vunpack.c.l.b16 %v1258
    %v1391 = vunpack.c.l.b16 %v1259
    %v1392 = vunpack.c.l.b16 %v1260
    %v1393 = vunpack.c.l.b16 %v1261
    %v1394 = vunpack.c.l.b16 %v1262
    %v1395 = vunpack.c.l.b16 %v1263
    %v1396 = vunpack.c.l.b16 %v1264
    %v1397 = vunpack.c.l.b16 %v1265
    %v1398 = vunpack.c.l.b16 %v1266
    %v1399 = vunpack.c.l.b16 %v1267
    %v1400 = vunpack.c.l.b16 %v1268
    %v1401 = vunpack.c.l.b16 %v1269
    %v1402 = vunpack.c.l.b16 %v1270
    %v1403 = vunpack.c.l.b16 %v1271
    %v1404 = vunpack.c.l.b16 %v1272
    %v1405 = vunpack.c.l.b16 %v1273
    %v1406 = vunpack.c.l.b16 %v1274
    %v1407 = vunpack.c.l.b16 %v1275
    %v1408 = vpack.c.b16 %v1345, %v1344
    %v1409 = vpack.c.b16 %v1347, %v1346
    %v1410 = vpack.c.b16 %v1349, %v1348
    %v1411 = vpack.c.b16 %v1351, %v1350
    %v1412 = vpack.c.b16 %v1353, %v1352
    %v1413 = vpack.c.b16 %v1355, %v1354
    %v1414 = vpack.c.b16 %v1357, %v1356
    %v1415 = vpack.c.b16 %v1359, %v1358
    %v1416 = vpack.c.b16 %v1361, %v1360
    %v1417 = vpack.c.b16 %v1363, %v1362
    %v1418 = vpack.c.b16 %v1365, %v1364
    %v1419 = vpack.c.b16 %v1367, %v1366
    %v1420 = vpack.c.b16 %v1369, %v1368
    %v1421 = vpack.c.b16 %v1371, %v1370
    %v1422 = vpack.c.b16 %v1373, %v1372
    %v1423 = vpack.c.b16 %v1375, %v1374
    %v1424 = vpack.c.b16 %v1377, %v1376
    %v1425 = vpack.c.b16 %v1379, %v1378
    %v1426 = vpack.c.b16 %v1381, %v1380
    %v1427 = vpack.c.b16 %v1383, %v1382
    %v1428 = vpack.c.b16 %v1385, %v1384
    %v1429 = vpack.c.b16 %v1387, %v1386
    %v1430 = vpack.c.b16 %v1389, %v1388
    %v1431 = vpack.c.b16 %v1391, %v1390
    %v1432 = vpack.c.b16 %v1393, %v1392
    %v1433 = vpack.c.b16 %v1395, %v1394
    %v1434 = vpack.c.b16 %v1397, %v1396
    %v1435 = vpack.c.b16 %v1399, %v1398
    %v1436 = vpack.c.b16 %v1401, %v1400
    %v1437 = vpack.c.b16 %v1403, %v1402
    %v1438 = vpack.c.b16 %v1405, %v1404
    %v1439 = vpack.c.b16 %v1407, %v1406
    %1472 = vmatpush.bf16.msra.mxu0 %v1415
    %1473 = vmatpush.bf16.msra.mxu0 %v1414
    %1474 = vmatpush.bf16.msra.mxu0 %v1413
    %1475 = vmatpush.bf16.msra.mxu0 %v1412
    %1476 = vmatpush.bf16.msra.mxu0 %v1411
    %1477 = vmatpush.bf16.msra.mxu0 %v1410
    %1478 = vmatpush.bf16.msra.mxu0 %v1409
    %1479 = vmatpush.bf16.msra.mxu0 %v1408
    %1480 = vmatmul.bf16.gmra.mxu0 %v1208
    %v1481 = vpop.f32.mrf.mxu0
    %v1482 = vadd.f32 %v1278, %v1481
    %v1483 = vpop.f32.mrf.mxu0
    %1484 = vdwg.mxu0
    %1485 = vmatpush.bf16.msra.mxu0 %v1423
    %1486 = vmatpush.bf16.msra.mxu0 %v1422
    %1487 = vmatpush.bf16.msra.mxu0 %v1421
    %1488 = vmatpush.bf16.msra.mxu0 %v1420
    %1489 = vmatpush.bf16.msra.mxu0 %v1419
    %1490 = vmatpush.bf16.msra.mxu0 %v1418
    %1491 = vmatpush.bf16.msra.mxu0 %v1417
    %1492 = vmatpush.bf16.msra.mxu0 %v1416
    %1493 = vmatmul.bf16.gmra.mxu0 %v1209
    %v1494 = vpop.f32.mrf.mxu0
    %v1495 = vadd.f32 %v1482, %v1494
    %v1496 = vpop.f32.mrf.mxu0
    %1497 = vdwg.mxu0
    %1498 = vmatpush.bf16.msra.mxu0 %v1431
    %1499 = vmatpush.bf16.msra.mxu0 %v1430
    %1500 = vmatpush.bf16.msra.mxu0 %v1429
    %1501 = vmatpush.bf16.msra.mxu0 %v1428
    %1502 = vmatpush.bf16.msra.mxu0 %v1427
    %1503 = vmatpush.bf16.msra.mxu0 %v1426
    %1504 = vmatpush.bf16.msra.mxu0 %v1425
    %1505 = vmatpush.bf16.msra.mxu0 %v1424
    %1506 = vmatmul.bf16.gmra.mxu0 %v1210
    %v1507 = vpop.f32.mrf.mxu0
    %v1508 = vadd.f32 %v1495, %v1507
    %v1509 = vpop.f32.mrf.mxu0
    %1510 = vdwg.mxu0
    %1511 = vmatpush.bf16.msra.mxu0 %v1439
    %1512 = vmatpush.bf16.msra.mxu0 %v1438
    %1513 = vmatpush.bf16.msra.mxu0 %v1437
    %1514 = vmatpush.bf16.msra.mxu0 %v1436
    %1515 = vmatpush.bf16.msra.mxu0 %v1435
    %1516 = vmatpush.bf16.msra.mxu0 %v1434
    %1517 = vmatpush.bf16.msra.mxu0 %v1433
    %1518 = vmatpush.bf16.msra.mxu0 %v1432
    %1519 = vmatmul.bf16.gmra.mxu0 %v1211
    %v1520 = vpop.f32.mrf.mxu0
    %v1521 = vadd.f32 %v1508, %v1520
    %v1522 = vpop.f32.mrf.mxu0
    %1523 = vdwg.mxu0
    %v1524 = vmax.f32 %v1521, 0.0
    %v1525 = vpack.c.bf16 %v1524, %v1524
    %v1526 = vld [vmem:[%s7] sm:$0xf]
    %v1527 = vld [vmem:[%s7 + $0x4] sm:$0xf]
    %v1528 = vld [vmem:[%s7 + $0x8] sm:$0xf]
    %v1529 = vld [vmem:[%s7 + $0xc] sm:$0xf]
    %v1530 = vld [vmem:[%s7 + $0x10] sm:$0xf]
    %v1531 = vld [vmem:[%s7 + $0x14] sm:$0xf]
    %v1532 = vld [vmem:[%s7 + $0x18] sm:$0xf]
    %v1533 = vld [vmem:[%s7 + $0x1c] sm:$0xf]
    %v1534 = vld [vmem:[%s7 + $0x20] sm:$0xf]
    %v1535 = vld [vmem:[%s7 + $0x24] sm:$0xf]
    %v1536 = vld [vmem:[%s7 + $0x28] sm:$0xf]
    %v1537 = vld [vmem:[%s7 + $0x2c] sm:$0xf]
    %v1538 = vld [vmem:[%s7 + $0x30] sm:$0xf]
    %v1539 = vld [vmem:[%s7 + $0x34] sm:$0xf]
    %v1540 = vld [vmem:[%s7 + $0x38] sm:$0xf]
    %v1541 = vld [vmem:[%s7 + $0x3c] sm:$0xf]
    %v1542 = vld [vmem:[#allocation2] sm:$0x1]
    %v1544 = vperm.slane %v1542, 0
    %v1562 = vunpack.c.l.b16 %v1526
    %v1563 = vunpack.c.l.b16 %v1527
    %v1564 = vunpack.c.l.b16 %v1528
    %v1565 = vunpack.c.l.b16 %v1529
    %v1566 = vunpack.c.l.b16 %v1530
    %v1567 = vunpack.c.l.b16 %v1531
    %v1568 = vunpack.c.l.b16 %v1532
    %v1569 = vunpack.c.l.b16 %v1533
    %v1570 = vunpack.c.l.b16 %v1534
    %v1571 = vunpack.c.l.b16 %v1535
    %v1572 = vunpack.c.l.b16 %v1536
    %v1573 = vunpack.c.l.b16 %v1537
    %v1574 = vunpack.c.l.b16 %v1538
    %v1575 = vunpack.c.l.b16 %v1539
    %v1576 = vunpack.c.l.b16 %v1540
    %v1577 = vunpack.c.l.b16 %v1541
    %v1578 = vpack.c.b16 %v1563, %v1562
    %v1579 = vpack.c.b16 %v1565, %v1564
    %v1580 = vpack.c.b16 %v1567, %v1566
    %v1581 = vpack.c.b16 %v1569, %v1568
    %v1582 = vpack.c.b16 %v1571, %v1570
    %v1583 = vpack.c.b16 %v1573, %v1572
    %v1584 = vpack.c.b16 %v1575, %v1574
    %v1585 = vpack.c.b16 %v1577, %v1576
    %1594 = vmatpush.bf16.msra.mxu0 %v1585
    %1595 = vmatpush.bf16.msra.mxu0 %v1584
    %1596 = vmatpush.bf16.msra.mxu0 %v1583
    %1597 = vmatpush.bf16.msra.mxu0 %v1582
    %1598 = vmatpush.bf16.msra.mxu0 %v1581
    %1599 = vmatpush.bf16.msra.mxu0 %v1580
    %1600 = vmatpush.bf16.msra.mxu0 %v1579
    %1601 = vmatpush.bf16.msra.mxu0 %v1578
    %1602 = vmatmul.bf16.gmra.mxu0 %v1525
    %v1603 = vpop.f32.mrf.mxu0
    %v1604 = vadd.f32 %v1544, %v1603
    %v1605 = vpop.f32.mrf.mxu0
    %1606 = vdwg.mxu0
    %vm1607 = vcmask 7168
    %1608 = vst.msk [vmem:[%s9] sm:$0xff] %vm1607, %v1604
    // Predicated region
    $region54: #{_critic_forward.1} parent=1 // pred_check
      _
    $region55: #{_critic_forward.1} parent=1 // pred_check_branch
      %1610 = sbr.rel (0) target = $region57
    $region56: #{_critic_forward.1} parent=1 // pred_region
      _
    $region57: #{_critic_forward.1} parent=1 // pred_fallthru
      _
    // Predicated region
    $region58: #{_critic_forward.1} parent=1 // pred_check
      _
    $region59: #{_critic_forward.1} parent=1 // pred_check_branch
      %1612 = sbr.rel (0) target = $region61
    $region60: #{_critic_forward.1} parent=1 // pred_region
      _
    $region61: #{_critic_forward.1} parent=1 // pred_fallthru
      _
    %1613 = vsyncpa [#allocation4], 1
    %1614 = vsyncpa [#allocation6], 1
    %1615 = vsyncpa [#allocation9], 1

</llo_original>
